<compile_context>
chip_gen: v7x
topology: tpu7x:2x2x1
jax: 0.10.0
libtpu: 0.0.40
codegen_flags: <defaults>
</compile_context>

<pallas_src>
import jax
import jax.numpy as jnp
import numpy as np
from jax.experimental import pallas as pl
from jax.experimental.pallas import tpu as pltpu


# ---------------------------------------------------------------------------
# Fused kernel: BiLSTM over time + attention + fc, one batch tile per grid step
# ---------------------------------------------------------------------------
def _bilstm_attn_kernel(x_ref, wz_ref, bias_ref, attw_ref, fcw_ref, fcb_ref,
                        out_ref):
    f32 = jnp.float32
    T, TB, _ = x_ref.shape
    H8 = wz_ref.shape[1]
    H = H8 // 8
    H4, H2 = 4 * H, 2 * H

    def dot(a, b):
        return jnp.dot(a, b, preferred_element_type=f32)

    def sigmoid(z):
        return 1.0 / (1.0 + jnp.exp(-z))

    def gates(pre):  # PyTorch gate order: i, f, g, o
        return (sigmoid(pre[:, 0:H]),
                sigmoid(pre[:, H:2 * H]),
                jnp.tanh(pre[:, 2 * H:3 * H]),
                sigmoid(pre[:, 3 * H:4 * H]))

    wz = wz_ref[...]          # (2I+2H, 8H) block matrix: [Wih_f|Wih_b|Whh_f|Whh_b]
    bias = bias_ref[...]      # (1, 8H)     [b_f | b_b] (ih+hh summed)

    h_f = jnp.zeros((TB, H), f32)
    c_f = jnp.zeros((TB, H), f32)
    h_b = jnp.zeros((TB, H), f32)
    c_b = jnp.zeros((TB, H), f32)
    outs_f = [None] * T
    outs_b = [None] * T

    # Sequential recurrence; forward step t and backward step T-1-t share one
    # fused MXU matmul.  T is small/static -> unrolled.
    for t in range(T):
        z = jnp.concatenate([x_ref[t], x_ref[T - 1 - t], h_f, h_b], axis=1)
        pre = dot(z, wz) + bias                 # (TB, 8H)

        i, f, g, o = gates(pre[:, :H4])         # forward direction
        c_f = f * c_f + i * g
        h_f = o * jnp.tanh(c_f)

        i, f, g, o = gates(pre[:, H4:])         # backward direction
        c_b = f * c_b + i * g
        h_b = o * jnp.tanh(c_b)

        outs_f[t] = h_f
        outs_b[T - 1 - t] = h_b

    # ---- attention: softmax over time of <lstm_out_t, w>, weighted sum ------
    attw = attw_ref[...]                        # (1, 2H)
    outs = [None] * T
    cols = [None] * T
    for t in range(T):
        o_t = jnp.concatenate([outs_f[t], outs_b[t]], axis=1)    # (TB, 2H)
        outs[t] = o_t
        cols[t] = jnp.sum(o_t * attw, axis=1, keepdims=True)     # (TB, 1)
    logits = jnp.concatenate(cols, axis=1)                       # (TB, T)
    m = jnp.max(logits, axis=1, keepdims=True)
    e = jnp.exp(logits - m)
    p_att = e / jnp.sum(e, axis=1, keepdims=True)                # (TB, T)

    att = jnp.zeros((TB, H2), f32)
    for t in range(T):
        att = att + outs[t] * p_att[:, t:t + 1]                  # (TB, 2H)

    # ---- final Linear(2H -> out_dim) ----------------------------------------
    out_ref[...] = dot(att, fcw_ref[...]) + fcb_ref[...]


# ---------------------------------------------------------------------------
# Parameter init (PyTorch nn.LSTM / nn.Linear layout) and one-time packing
# ---------------------------------------------------------------------------
def init_params(key, input_size, hidden_size, output_dim=2):
    ks = jax.random.split(key, 11)
    H = hidden_size

    def w(k, shape, scale=0.1):
        return scale * jax.random.normal(k, shape, jnp.float32)

    return {
        "w_ih_f": w(ks[0], (4 * H, input_size)),
        "w_hh_f": w(ks[1], (4 * H, H)),
        "b_ih_f": w(ks[2], (4 * H,), 0.05),
        "b_hh_f": w(ks[3], (4 * H,), 0.05),
        "w_ih_b": w(ks[4], (4 * H, input_size)),
        "w_hh_b": w(ks[5], (4 * H, H)),
        "b_ih_b": w(ks[6], (4 * H,), 0.05),
        "b_hh_b": w(ks[7], (4 * H,), 0.05),
        "att_w": w(ks[8], (2 * H, 1), 0.2),
        "fc_w": w(ks[9], (output_dim, 2 * H)),
        "fc_b": w(ks[10], (output_dim,), 0.05),
    }


def pack_params(p):
    """One-time weight packing (done outside the per-call forward)."""
    H = p["w_hh_f"].shape[1]
    I = p["w_ih_f"].shape[1]
    # Block matrix so [x_t | x_rev | h_f | h_b] @ wz gives both directions'
    # pre-activations in one matmul.
    wz = jnp.zeros((2 * I + 2 * H, 8 * H), jnp.float32)
    wz = wz.at[:I, :4 * H].set(p["w_ih_f"].T)
    wz = wz.at[I:2 * I, 4 * H:].set(p["w_ih_b"].T)
    wz = wz.at[2 * I:2 * I + H, :4 * H].set(p["w_hh_f"].T)
    wz = wz.at[2 * I + H:, 4 * H:].set(p["w_hh_b"].T)
    bias = jnp.concatenate([p["b_ih_f"] + p["b_hh_f"],
                            p["b_ih_b"] + p["b_hh_b"]]).reshape(1, 8 * H)
    return {
        "wz": wz,
        "bias": bias,
        "attw": p["att_w"].reshape(1, 2 * H),
        "fcw": p["fc_w"].T,                       # (2H, out_dim)
        "fcb": p["fc_b"].reshape(1, -1),
    }


# ---------------------------------------------------------------------------
# Forward wrapper
# ---------------------------------------------------------------------------
def _round_up(n, m):
    return ((n + m - 1) // m) * m


def _bcast_spec(shape):
    zeros = (0,) * len(shape)
    return pl.BlockSpec(shape, lambda b, z=zeros: z)


def bilstm_attention_pallas(x, packed, *, block_b=128):
    B, T, I = x.shape
    out_dim = packed["fcw"].shape[1]

    # Batch tile: multiple of 8 sublanes, up to block_b rows per grid step.
    TB = min(block_b, _round_up(B, 8))
    B_pad = _round_up(B, TB)
    if B_pad != B:
        x = jnp.pad(x, ((0, B_pad - B), (0, 0), (0, 0)))

    # Time-major layout: (T, B_pad, I) so the kernel indexes time on the
    # leading axis and batch tiles are contiguous blocks on the middle axis.
    x_t = jnp.transpose(x, (1, 0, 2))

    out = pl.pallas_call(
        _bilstm_attn_kernel,
        out_shape=jax.ShapeDtypeStruct((B_pad, out_dim), jnp.float32),
        grid=(B_pad // TB,),
        in_specs=[
            pl.BlockSpec((T, TB, I), lambda b: (0, b, 0)),
            _bcast_spec(packed["wz"].shape),
            _bcast_spec(packed["bias"].shape),
            _bcast_spec(packed["attw"].shape),
            _bcast_spec(packed["fcw"].shape),
            _bcast_spec(packed["fcb"].shape),
        ],
        out_specs=pl.BlockSpec((TB, out_dim), lambda b: (b, 0)),
        compiler_params=pltpu.CompilerParams(
            dimension_semantics=("parallel",)),
    )(x_t, packed["wz"], packed["bias"], packed["attw"],
      packed["fcw"], packed["fcb"])
    return out[:B]


# ---------------------------------------------------------------------------
# Pure-JAX reference (mirrors the PyTorch forward exactly)
# ---------------------------------------------------------------------------
def reference_forward(x, p):
    B, T, _ = x.shape
    H = p["w_hh_f"].shape[1]

    def cell(xt, h, c, wih, whh, bih, bhh):
        pre = xt @ wih.T + bih + h @ whh.T + bhh
        i = jax.nn.sigmoid(pre[:, :H])
        f = jax.nn.sigmoid(pre[:, H:2 * H])
        g = jnp.tanh(pre[:, 2 * H:3 * H])
        o = jax.nn.sigmoid(pre[:, 3 * H:])
        c = f * c + i * g
        h = o * jnp.tanh(c)
        return h, c

    h = jnp.zeros((B, H), jnp.float32)
    c = jnp.zeros((B, H), jnp.float32)
    fw = []
    for t in range(T):
        h, c = cell(x[:, t], h, c, p["w_ih_f"], p["w_hh_f"],
                    p["b_ih_f"], p["b_hh_f"])
        fw.append(h)

    h = jnp.zeros((B, H), jnp.float32)
    c = jnp.zeros((B, H), jnp.float32)
    bw = [None] * T
    for t in range(T - 1, -1, -1):
        h, c = cell(x[:, t], h, c, p["w_ih_b"], p["w_hh_b"],
                    p["b_ih_b"], p["b_hh_b"])
        bw[t] = h

    lstm_out = jnp.stack(
        [jnp.concatenate([fw[t], bw[t]], axis=1) for t in range(T)], axis=1)
    scores = lstm_out @ p["att_w"]                    # (B, T, 1)
    scores = jax.nn.softmax(scores, axis=1)
    att = jnp.sum(lstm_out * scores, axis=1)          # (B, 2H)
    return att @ p["fc_w"].T + p["fc_b"]


if __name__ == "__main__":
    key = jax.random.PRNGKey(0)
    kp, kx = jax.random.split(key)

    B, T, INPUT, HIDDEN = 8, 8, 16, 32
    params = init_params(kp, INPUT, HIDDEN, output_dim=2)
    packed = pack_params(params)
    x = jax.random.normal(kx, (B, T, INPUT), jnp.float32)

    out = bilstm_attention_pallas(x, packed)
    out = jax.block_until_ready(out)

    ref = reference_forward(x, params)
    np.testing.assert_allclose(np.asarray(out), np.asarray(ref),
                               atol=5e-3, rtol=5e-3)
    assert out.shape == (B, 2)
    print("KERNEL_OK")
</pallas_src>

<mosaic_0001>
module attributes {stable_mosaic.version = 11 : i64} {
  func.func @_bilstm_attn_kernel(%arg0: i32, %arg1: memref<8x8x16xf32, #tpu.memory_space<vmem>>, %arg2: memref<96x256xf32, #tpu.memory_space<vmem>>, %arg3: memref<1x256xf32, #tpu.memory_space<vmem>>, %arg4: memref<1x64xf32, #tpu.memory_space<vmem>>, %arg5: memref<64x2xf32, #tpu.memory_space<vmem>>, %arg6: memref<1x2xf32, #tpu.memory_space<vmem>>, %arg7: memref<8x2xf32, #tpu.memory_space<vmem>>) attributes {dimension_semantics = [#tpu.dimension_semantics<parallel>], iteration_bounds = array<i64: 1>, scalar_prefetch = 0 : i64, scratch_operands = 0 : i64, tpu.core_type = #tpu.core_type<tc>, window_params = [{transform_indices = @transform_0, window_bounds = array<i64: 8, 8, 16>}, {pipeline_mode = #tpu.pipeline_mode<synchronous>, transform_indices = @transform_1, window_bounds = array<i64: 96, 256>}, {pipeline_mode = #tpu.pipeline_mode<synchronous>, transform_indices = @transform_2, window_bounds = array<i64: 1, 256>}, {pipeline_mode = #tpu.pipeline_mode<synchronous>, transform_indices = @transform_3, window_bounds = array<i64: 1, 64>}, {pipeline_mode = #tpu.pipeline_mode<synchronous>, transform_indices = @transform_4, window_bounds = array<i64: 64, 2>}, {pipeline_mode = #tpu.pipeline_mode<synchronous>, transform_indices = @transform_5, window_bounds = array<i64: 1, 2>}, {transform_indices = @transform_6, window_bounds = array<i64: 8, 2>}]} {
    %c0 = arith.constant 0 : index
    %c0_0 = arith.constant 0 : index
    %0 = vector.load %arg2[%c0, %c0_0] : memref<96x256xf32, #tpu.memory_space<vmem>>, vector<96x256xf32>
    %c0_1 = arith.constant 0 : index
    %c0_2 = arith.constant 0 : index
    %1 = vector.load %arg3[%c0_1, %c0_2] : memref<1x256xf32, #tpu.memory_space<vmem>>, vector<1x256xf32>
    %cst = arith.constant 0.000000e+00 : f32
    %2 = vector.broadcast %cst : f32 to vector<8x32xf32>
    %cst_3 = arith.constant 0.000000e+00 : f32
    %3 = vector.broadcast %cst_3 : f32 to vector<8x32xf32>
    %cst_4 = arith.constant 0.000000e+00 : f32
    %4 = vector.broadcast %cst_4 : f32 to vector<8x32xf32>
    %cst_5 = arith.constant 0.000000e+00 : f32
    %5 = vector.broadcast %cst_5 : f32 to vector<8x32xf32>
    %c0_6 = arith.constant 0 : index
    %c0_7 = arith.constant 0 : index
    %c0_8 = arith.constant 0 : index
    %6 = vector.load %arg1[%c0_6, %c0_7, %c0_8] : memref<8x8x16xf32, #tpu.memory_space<vmem>>, vector<1x8x16xf32>
    %7 = vector.shape_cast %6 : vector<1x8x16xf32> to vector<8x16xf32>
    %c7 = arith.constant 7 : index
    %c0_9 = arith.constant 0 : index
    %c0_10 = arith.constant 0 : index
    %8 = vector.load %arg1[%c7, %c0_9, %c0_10] : memref<8x8x16xf32, #tpu.memory_space<vmem>>, vector<1x8x16xf32>
    %9 = vector.shape_cast %8 : vector<1x8x16xf32> to vector<8x16xf32>
    %10 = tpu.concatenate %7, %9, %2, %4 in 1 : vector<8x16xf32>, vector<8x16xf32>, vector<8x32xf32>, vector<8x32xf32> -> vector<8x96xf32>
    %cst_11 = arith.constant dense<0.000000e+00> : vector<8x256xf32>
    %11 = tpu.matmul %10, %0, %cst_11 {dimension_numbers = #tpu.dot_dimension_numbers<[1], [0], [0], [1], [0, 0, 1, 1], [], []>} : vector<8x96xf32>, vector<96x256xf32>, vector<8x256xf32> -> vector<8x256xf32>
    %12 = vector.broadcast %1 : vector<1x256xf32> to vector<8x256xf32>
    %13 = arith.addf %11, %12 : vector<8x256xf32>
    %14 = vector.extract_strided_slice %13 {offsets = [0, 0], sizes = [8, 128], strides = [1, 1]} : vector<8x256xf32> to vector<8x128xf32>
    %15 = vector.extract_strided_slice %14 {offsets = [0, 0], sizes = [8, 32], strides = [1, 1]} : vector<8x128xf32> to vector<8x32xf32>
    %cst_12 = arith.constant 0.000000e+00 : f32
    %16 = vector.broadcast %cst_12 : f32 to vector<8x32xf32>
    %17 = arith.subf %16, %15 : vector<8x32xf32>
    %18 = math.exp %17 : vector<8x32xf32>
    %cst_13 = arith.constant 1.000000e+00 : f32
    %19 = vector.broadcast %cst_13 : f32 to vector<8x32xf32>
    %20 = arith.addf %19, %18 : vector<8x32xf32>
    %cst_14 = arith.constant 1.000000e+00 : f32
    %21 = vector.broadcast %cst_14 : f32 to vector<8x32xf32>
    %22 = arith.divf %21, %20 : vector<8x32xf32>
    %23 = vector.extract_strided_slice %14 {offsets = [0, 32], sizes = [8, 32], strides = [1, 1]} : vector<8x128xf32> to vector<8x32xf32>
    %cst_15 = arith.constant 0.000000e+00 : f32
    %24 = vector.broadcast %cst_15 : f32 to vector<8x32xf32>
    %25 = arith.subf %24, %23 : vector<8x32xf32>
    %26 = math.exp %25 : vector<8x32xf32>
    %cst_16 = arith.constant 1.000000e+00 : f32
    %27 = vector.broadcast %cst_16 : f32 to vector<8x32xf32>
    %28 = arith.addf %27, %26 : vector<8x32xf32>
    %cst_17 = arith.constant 1.000000e+00 : f32
    %29 = vector.broadcast %cst_17 : f32 to vector<8x32xf32>
    %30 = arith.divf %29, %28 : vector<8x32xf32>
    %31 = vector.extract_strided_slice %14 {offsets = [0, 64], sizes = [8, 32], strides = [1, 1]} : vector<8x128xf32> to vector<8x32xf32>
    %32 = math.tanh %31 : vector<8x32xf32>
    %33 = vector.extract_strided_slice %14 {offsets = [0, 96], sizes = [8, 32], strides = [1, 1]} : vector<8x128xf32> to vector<8x32xf32>
    %cst_18 = arith.constant 0.000000e+00 : f32
    %34 = vector.broadcast %cst_18 : f32 to vector<8x32xf32>
    %35 = arith.subf %34, %33 : vector<8x32xf32>
    %36 = math.exp %35 : vector<8x32xf32>
    %cst_19 = arith.constant 1.000000e+00 : f32
    %37 = vector.broadcast %cst_19 : f32 to vector<8x32xf32>
    %38 = arith.addf %37, %36 : vector<8x32xf32>
    %cst_20 = arith.constant 1.000000e+00 : f32
    %39 = vector.broadcast %cst_20 : f32 to vector<8x32xf32>
    %40 = arith.divf %39, %38 : vector<8x32xf32>
    %41 = arith.mulf %30, %3 : vector<8x32xf32>
    %42 = arith.mulf %22, %32 : vector<8x32xf32>
    %43 = arith.addf %41, %42 : vector<8x32xf32>
    %44 = math.tanh %43 : vector<8x32xf32>
    %45 = arith.mulf %40, %44 : vector<8x32xf32>
    %46 = vector.extract_strided_slice %13 {offsets = [0, 128], sizes = [8, 128], strides = [1, 1]} : vector<8x256xf32> to vector<8x128xf32>
    %47 = vector.extract_strided_slice %46 {offsets = [0, 0], sizes = [8, 32], strides = [1, 1]} : vector<8x128xf32> to vector<8x32xf32>
    %cst_21 = arith.constant 0.000000e+00 : f32
    %48 = vector.broadcast %cst_21 : f32 to vector<8x32xf32>
    %49 = arith.subf %48, %47 : vector<8x32xf32>
    %50 = math.exp %49 : vector<8x32xf32>
    %cst_22 = arith.constant 1.000000e+00 : f32
    %51 = vector.broadcast %cst_22 : f32 to vector<8x32xf32>
    %52 = arith.addf %51, %50 : vector<8x32xf32>
    %cst_23 = arith.constant 1.000000e+00 : f32
    %53 = vector.broadcast %cst_23 : f32 to vector<8x32xf32>
    %54 = arith.divf %53, %52 : vector<8x32xf32>
    %55 = vector.extract_strided_slice %46 {offsets = [0, 32], sizes = [8, 32], strides = [1, 1]} : vector<8x128xf32> to vector<8x32xf32>
    %cst_24 = arith.constant 0.000000e+00 : f32
    %56 = vector.broadcast %cst_24 : f32 to vector<8x32xf32>
    %57 = arith.subf %56, %55 : vector<8x32xf32>
    %58 = math.exp %57 : vector<8x32xf32>
    %cst_25 = arith.constant 1.000000e+00 : f32
    %59 = vector.broadcast %cst_25 : f32 to vector<8x32xf32>
    %60 = arith.addf %59, %58 : vector<8x32xf32>
    %cst_26 = arith.constant 1.000000e+00 : f32
    %61 = vector.broadcast %cst_26 : f32 to vector<8x32xf32>
    %62 = arith.divf %61, %60 : vector<8x32xf32>
    %63 = vector.extract_strided_slice %46 {offsets = [0, 64], sizes = [8, 32], strides = [1, 1]} : vector<8x128xf32> to vector<8x32xf32>
    %64 = math.tanh %63 : vector<8x32xf32>
    %65 = vector.extract_strided_slice %46 {offsets = [0, 96], sizes = [8, 32], strides = [1, 1]} : vector<8x128xf32> to vector<8x32xf32>
    %cst_27 = arith.constant 0.000000e+00 : f32
    %66 = vector.broadcast %cst_27 : f32 to vector<8x32xf32>
    %67 = arith.subf %66, %65 : vector<8x32xf32>
    %68 = math.exp %67 : vector<8x32xf32>
    %cst_28 = arith.constant 1.000000e+00 : f32
    %69 = vector.broadcast %cst_28 : f32 to vector<8x32xf32>
    %70 = arith.addf %69, %68 : vector<8x32xf32>
    %cst_29 = arith.constant 1.000000e+00 : f32
    %71 = vector.broadcast %cst_29 : f32 to vector<8x32xf32>
    %72 = arith.divf %71, %70 : vector<8x32xf32>
    %73 = arith.mulf %62, %5 : vector<8x32xf32>
    %74 = arith.mulf %54, %64 : vector<8x32xf32>
    %75 = arith.addf %73, %74 : vector<8x32xf32>
    %76 = math.tanh %75 : vector<8x32xf32>
    %77 = arith.mulf %72, %76 : vector<8x32xf32>
    %c1 = arith.constant 1 : index
    %c0_30 = arith.constant 0 : index
    %c0_31 = arith.constant 0 : index
    %78 = vector.load %arg1[%c1, %c0_30, %c0_31] : memref<8x8x16xf32, #tpu.memory_space<vmem>>, vector<1x8x16xf32>
    %79 = vector.shape_cast %78 : vector<1x8x16xf32> to vector<8x16xf32>
    %c6 = arith.constant 6 : index
    %c0_32 = arith.constant 0 : index
    %c0_33 = arith.constant 0 : index
    %80 = vector.load %arg1[%c6, %c0_32, %c0_33] : memref<8x8x16xf32, #tpu.memory_space<vmem>>, vector<1x8x16xf32>
    %81 = vector.shape_cast %80 : vector<1x8x16xf32> to vector<8x16xf32>
    %82 = tpu.concatenate %79, %81, %45, %77 in 1 : vector<8x16xf32>, vector<8x16xf32>, vector<8x32xf32>, vector<8x32xf32> -> vector<8x96xf32>
    %cst_34 = arith.constant dense<0.000000e+00> : vector<8x256xf32>
    %83 = tpu.matmul %82, %0, %cst_34 {dimension_numbers = #tpu.dot_dimension_numbers<[1], [0], [0], [1], [0, 0, 1, 1], [], []>} : vector<8x96xf32>, vector<96x256xf32>, vector<8x256xf32> -> vector<8x256xf32>
    %84 = vector.broadcast %1 : vector<1x256xf32> to vector<8x256xf32>
    %85 = arith.addf %83, %84 : vector<8x256xf32>
    %86 = vector.extract_strided_slice %85 {offsets = [0, 0], sizes = [8, 128], strides = [1, 1]} : vector<8x256xf32> to vector<8x128xf32>
    %87 = vector.extract_strided_slice %86 {offsets = [0, 0], sizes = [8, 32], strides = [1, 1]} : vector<8x128xf32> to vector<8x32xf32>
    %cst_35 = arith.constant 0.000000e+00 : f32
    %88 = vector.broadcast %cst_35 : f32 to vector<8x32xf32>
    %89 = arith.subf %88, %87 : vector<8x32xf32>
    %90 = math.exp %89 : vector<8x32xf32>
    %cst_36 = arith.constant 1.000000e+00 : f32
    %91 = vector.broadcast %cst_36 : f32 to vector<8x32xf32>
    %92 = arith.addf %91, %90 : vector<8x32xf32>
    %cst_37 = arith.constant 1.000000e+00 : f32
    %93 = vector.broadcast %cst_37 : f32 to vector<8x32xf32>
    %94 = arith.divf %93, %92 : vector<8x32xf32>
    %95 = vector.extract_strided_slice %86 {offsets = [0, 32], sizes = [8, 32], strides = [1, 1]} : vector<8x128xf32> to vector<8x32xf32>
    %cst_38 = arith.constant 0.000000e+00 : f32
    %96 = vector.broadcast %cst_38 : f32 to vector<8x32xf32>
    %97 = arith.subf %96, %95 : vector<8x32xf32>
    %98 = math.exp %97 : vector<8x32xf32>
    %cst_39 = arith.constant 1.000000e+00 : f32
    %99 = vector.broadcast %cst_39 : f32 to vector<8x32xf32>
    %100 = arith.addf %99, %98 : vector<8x32xf32>
    %cst_40 = arith.constant 1.000000e+00 : f32
    %101 = vector.broadcast %cst_40 : f32 to vector<8x32xf32>
    %102 = arith.divf %101, %100 : vector<8x32xf32>
    %103 = vector.extract_strided_slice %86 {offsets = [0, 64], sizes = [8, 32], strides = [1, 1]} : vector<8x128xf32> to vector<8x32xf32>
    %104 = math.tanh %103 : vector<8x32xf32>
    %105 = vector.extract_strided_slice %86 {offsets = [0, 96], sizes = [8, 32], strides = [1, 1]} : vector<8x128xf32> to vector<8x32xf32>
    %cst_41 = arith.constant 0.000000e+00 : f32
    %106 = vector.broadcast %cst_41 : f32 to vector<8x32xf32>
    %107 = arith.subf %106, %105 : vector<8x32xf32>
    %108 = math.exp %107 : vector<8x32xf32>
    %cst_42 = arith.constant 1.000000e+00 : f32
    %109 = vector.broadcast %cst_42 : f32 to vector<8x32xf32>
    %110 = arith.addf %109, %108 : vector<8x32xf32>
    %cst_43 = arith.constant 1.000000e+00 : f32
    %111 = vector.broadcast %cst_43 : f32 to vector<8x32xf32>
    %112 = arith.divf %111, %110 : vector<8x32xf32>
    %113 = arith.mulf %102, %43 : vector<8x32xf32>
    %114 = arith.mulf %94, %104 : vector<8x32xf32>
    %115 = arith.addf %113, %114 : vector<8x32xf32>
    %116 = math.tanh %115 : vector<8x32xf32>
    %117 = arith.mulf %112, %116 : vector<8x32xf32>
    %118 = vector.extract_strided_slice %85 {offsets = [0, 128], sizes = [8, 128], strides = [1, 1]} : vector<8x256xf32> to vector<8x128xf32>
    %119 = vector.extract_strided_slice %118 {offsets = [0, 0], sizes = [8, 32], strides = [1, 1]} : vector<8x128xf32> to vector<8x32xf32>
    %cst_44 = arith.constant 0.000000e+00 : f32
    %120 = vector.broadcast %cst_44 : f32 to vector<8x32xf32>
    %121 = arith.subf %120, %119 : vector<8x32xf32>
    %122 = math.exp %121 : vector<8x32xf32>
    %cst_45 = arith.constant 1.000000e+00 : f32
    %123 = vector.broadcast %cst_45 : f32 to vector<8x32xf32>
    %124 = arith.addf %123, %122 : vector<8x32xf32>
    %cst_46 = arith.constant 1.000000e+00 : f32
    %125 = vector.broadcast %cst_46 : f32 to vector<8x32xf32>
    %126 = arith.divf %125, %124 : vector<8x32xf32>
    %127 = vector.extract_strided_slice %118 {offsets = [0, 32], sizes = [8, 32], strides = [1, 1]} : vector<8x128xf32> to vector<8x32xf32>
    %cst_47 = arith.constant 0.000000e+00 : f32
    %128 = vector.broadcast %cst_47 : f32 to vector<8x32xf32>
    %129 = arith.subf %128, %127 : vector<8x32xf32>
    %130 = math.exp %129 : vector<8x32xf32>
    %cst_48 = arith.constant 1.000000e+00 : f32
    %131 = vector.broadcast %cst_48 : f32 to vector<8x32xf32>
    %132 = arith.addf %131, %130 : vector<8x32xf32>
    %cst_49 = arith.constant 1.000000e+00 : f32
    %133 = vector.broadcast %cst_49 : f32 to vector<8x32xf32>
    %134 = arith.divf %133, %132 : vector<8x32xf32>
    %135 = vector.extract_strided_slice %118 {offsets = [0, 64], sizes = [8, 32], strides = [1, 1]} : vector<8x128xf32> to vector<8x32xf32>
    %136 = math.tanh %135 : vector<8x32xf32>
    %137 = vector.extract_strided_slice %118 {offsets = [0, 96], sizes = [8, 32], strides = [1, 1]} : vector<8x128xf32> to vector<8x32xf32>
    %cst_50 = arith.constant 0.000000e+00 : f32
    %138 = vector.broadcast %cst_50 : f32 to vector<8x32xf32>
    %139 = arith.subf %138, %137 : vector<8x32xf32>
    %140 = math.exp %139 : vector<8x32xf32>
    %cst_51 = arith.constant 1.000000e+00 : f32
    %141 = vector.broadcast %cst_51 : f32 to vector<8x32xf32>
    %142 = arith.addf %141, %140 : vector<8x32xf32>
    %cst_52 = arith.constant 1.000000e+00 : f32
    %143 = vector.broadcast %cst_52 : f32 to vector<8x32xf32>
    %144 = arith.divf %143, %142 : vector<8x32xf32>
    %145 = arith.mulf %134, %75 : vector<8x32xf32>
    %146 = arith.mulf %126, %136 : vector<8x32xf32>
    %147 = arith.addf %145, %146 : vector<8x32xf32>
    %148 = math.tanh %147 : vector<8x32xf32>
    %149 = arith.mulf %144, %148 : vector<8x32xf32>
    %c2 = arith.constant 2 : index
    %c0_53 = arith.constant 0 : index
    %c0_54 = arith.constant 0 : index
    %150 = vector.load %arg1[%c2, %c0_53, %c0_54] : memref<8x8x16xf32, #tpu.memory_space<vmem>>, vector<1x8x16xf32>
    %151 = vector.shape_cast %150 : vector<1x8x16xf32> to vector<8x16xf32>
    %c5 = arith.constant 5 : index
    %c0_55 = arith.constant 0 : index
    %c0_56 = arith.constant 0 : index
    %152 = vector.load %arg1[%c5, %c0_55, %c0_56] : memref<8x8x16xf32, #tpu.memory_space<vmem>>, vector<1x8x16xf32>
    %153 = vector.shape_cast %152 : vector<1x8x16xf32> to vector<8x16xf32>
    %154 = tpu.concatenate %151, %153, %117, %149 in 1 : vector<8x16xf32>, vector<8x16xf32>, vector<8x32xf32>, vector<8x32xf32> -> vector<8x96xf32>
    %cst_57 = arith.constant dense<0.000000e+00> : vector<8x256xf32>
    %155 = tpu.matmul %154, %0, %cst_57 {dimension_numbers = #tpu.dot_dimension_numbers<[1], [0], [0], [1], [0, 0, 1, 1], [], []>} : vector<8x96xf32>, vector<96x256xf32>, vector<8x256xf32> -> vector<8x256xf32>
    %156 = vector.broadcast %1 : vector<1x256xf32> to vector<8x256xf32>
    %157 = arith.addf %155, %156 : vector<8x256xf32>
    %158 = vector.extract_strided_slice %157 {offsets = [0, 0], sizes = [8, 128], strides = [1, 1]} : vector<8x256xf32> to vector<8x128xf32>
    %159 = vector.extract_strided_slice %158 {offsets = [0, 0], sizes = [8, 32], strides = [1, 1]} : vector<8x128xf32> to vector<8x32xf32>
    %cst_58 = arith.constant 0.000000e+00 : f32
    %160 = vector.broadcast %cst_58 : f32 to vector<8x32xf32>
    %161 = arith.subf %160, %159 : vector<8x32xf32>
    %162 = math.exp %161 : vector<8x32xf32>
    %cst_59 = arith.constant 1.000000e+00 : f32
    %163 = vector.broadcast %cst_59 : f32 to vector<8x32xf32>
    %164 = arith.addf %163, %162 : vector<8x32xf32>
    %cst_60 = arith.constant 1.000000e+00 : f32
    %165 = vector.broadcast %cst_60 : f32 to vector<8x32xf32>
    %166 = arith.divf %165, %164 : vector<8x32xf32>
    %167 = vector.extract_strided_slice %158 {offsets = [0, 32], sizes = [8, 32], strides = [1, 1]} : vector<8x128xf32> to vector<8x32xf32>
    %cst_61 = arith.constant 0.000000e+00 : f32
    %168 = vector.broadcast %cst_61 : f32 to vector<8x32xf32>
    %169 = arith.subf %168, %167 : vector<8x32xf32>
    %170 = math.exp %169 : vector<8x32xf32>
    %cst_62 = arith.constant 1.000000e+00 : f32
    %171 = vector.broadcast %cst_62 : f32 to vector<8x32xf32>
    %172 = arith.addf %171, %170 : vector<8x32xf32>
    %cst_63 = arith.constant 1.000000e+00 : f32
    %173 = vector.broadcast %cst_63 : f32 to vector<8x32xf32>
    %174 = arith.divf %173, %172 : vector<8x32xf32>
    %175 = vector.extract_strided_slice %158 {offsets = [0, 64], sizes = [8, 32], strides = [1, 1]} : vector<8x128xf32> to vector<8x32xf32>
    %176 = math.tanh %175 : vector<8x32xf32>
    %177 = vector.extract_strided_slice %158 {offsets = [0, 96], sizes = [8, 32], strides = [1, 1]} : vector<8x128xf32> to vector<8x32xf32>
    %cst_64 = arith.constant 0.000000e+00 : f32
    %178 = vector.broadcast %cst_64 : f32 to vector<8x32xf32>
    %179 = arith.subf %178, %177 : vector<8x32xf32>
    %180 = math.exp %179 : vector<8x32xf32>
    %cst_65 = arith.constant 1.000000e+00 : f32
    %181 = vector.broadcast %cst_65 : f32 to vector<8x32xf32>
    %182 = arith.addf %181, %180 : vector<8x32xf32>
    %cst_66 = arith.constant 1.000000e+00 : f32
    %183 = vector.broadcast %cst_66 : f32 to vector<8x32xf32>
    %184 = arith.divf %183, %182 : vector<8x32xf32>
    %185 = arith.mulf %174, %115 : vector<8x32xf32>
    %186 = arith.mulf %166, %176 : vector<8x32xf32>
    %187 = arith.addf %185, %186 : vector<8x32xf32>
    %188 = math.tanh %187 : vector<8x32xf32>
    %189 = arith.mulf %184, %188 : vector<8x32xf32>
    %190 = vector.extract_strided_slice %157 {offsets = [0, 128], sizes = [8, 128], strides = [1, 1]} : vector<8x256xf32> to vector<8x128xf32>
    %191 = vector.extract_strided_slice %190 {offsets = [0, 0], sizes = [8, 32], strides = [1, 1]} : vector<8x128xf32> to vector<8x32xf32>
    %cst_67 = arith.constant 0.000000e+00 : f32
    %192 = vector.broadcast %cst_67 : f32 to vector<8x32xf32>
    %193 = arith.subf %192, %191 : vector<8x32xf32>
    %194 = math.exp %193 : vector<8x32xf32>
    %cst_68 = arith.constant 1.000000e+00 : f32
    %195 = vector.broadcast %cst_68 : f32 to vector<8x32xf32>
    %196 = arith.addf %195, %194 : vector<8x32xf32>
    %cst_69 = arith.constant 1.000000e+00 : f32
    %197 = vector.broadcast %cst_69 : f32 to vector<8x32xf32>
    %198 = arith.divf %197, %196 : vector<8x32xf32>
    %199 = vector.extract_strided_slice %190 {offsets = [0, 32], sizes = [8, 32], strides = [1, 1]} : vector<8x128xf32> to vector<8x32xf32>
    %cst_70 = arith.constant 0.000000e+00 : f32
    %200 = vector.broadcast %cst_70 : f32 to vector<8x32xf32>
    %201 = arith.subf %200, %199 : vector<8x32xf32>
    %202 = math.exp %201 : vector<8x32xf32>
    %cst_71 = arith.constant 1.000000e+00 : f32
    %203 = vector.broadcast %cst_71 : f32 to vector<8x32xf32>
    %204 = arith.addf %203, %202 : vector<8x32xf32>
    %cst_72 = arith.constant 1.000000e+00 : f32
    %205 = vector.broadcast %cst_72 : f32 to vector<8x32xf32>
    %206 = arith.divf %205, %204 : vector<8x32xf32>
    %207 = vector.extract_strided_slice %190 {offsets = [0, 64], sizes = [8, 32], strides = [1, 1]} : vector<8x128xf32> to vector<8x32xf32>
    %208 = math.tanh %207 : vector<8x32xf32>
    %209 = vector.extract_strided_slice %190 {offsets = [0, 96], sizes = [8, 32], strides = [1, 1]} : vector<8x128xf32> to vector<8x32xf32>
    %cst_73 = arith.constant 0.000000e+00 : f32
    %210 = vector.broadcast %cst_73 : f32 to vector<8x32xf32>
    %211 = arith.subf %210, %209 : vector<8x32xf32>
    %212 = math.exp %211 : vector<8x32xf32>
    %cst_74 = arith.constant 1.000000e+00 : f32
    %213 = vector.broadcast %cst_74 : f32 to vector<8x32xf32>
    %214 = arith.addf %213, %212 : vector<8x32xf32>
    %cst_75 = arith.constant 1.000000e+00 : f32
    %215 = vector.broadcast %cst_75 : f32 to vector<8x32xf32>
    %216 = arith.divf %215, %214 : vector<8x32xf32>
    %217 = arith.mulf %206, %147 : vector<8x32xf32>
    %218 = arith.mulf %198, %208 : vector<8x32xf32>
    %219 = arith.addf %217, %218 : vector<8x32xf32>
    %220 = math.tanh %219 : vector<8x32xf32>
    %221 = arith.mulf %216, %220 : vector<8x32xf32>
    %c3 = arith.constant 3 : index
    %c0_76 = arith.constant 0 : index
    %c0_77 = arith.constant 0 : index
    %222 = vector.load %arg1[%c3, %c0_76, %c0_77] : memref<8x8x16xf32, #tpu.memory_space<vmem>>, vector<1x8x16xf32>
    %223 = vector.shape_cast %222 : vector<1x8x16xf32> to vector<8x16xf32>
    %c4 = arith.constant 4 : index
    %c0_78 = arith.constant 0 : index
    %c0_79 = arith.constant 0 : index
    %224 = vector.load %arg1[%c4, %c0_78, %c0_79] : memref<8x8x16xf32, #tpu.memory_space<vmem>>, vector<1x8x16xf32>
    %225 = vector.shape_cast %224 : vector<1x8x16xf32> to vector<8x16xf32>
    %226 = tpu.concatenate %223, %225, %189, %221 in 1 : vector<8x16xf32>, vector<8x16xf32>, vector<8x32xf32>, vector<8x32xf32> -> vector<8x96xf32>
    %cst_80 = arith.constant dense<0.000000e+00> : vector<8x256xf32>
    %227 = tpu.matmul %226, %0, %cst_80 {dimension_numbers = #tpu.dot_dimension_numbers<[1], [0], [0], [1], [0, 0, 1, 1], [], []>} : vector<8x96xf32>, vector<96x256xf32>, vector<8x256xf32> -> vector<8x256xf32>
    %228 = vector.broadcast %1 : vector<1x256xf32> to vector<8x256xf32>
    %229 = arith.addf %227, %228 : vector<8x256xf32>
    %230 = vector.extract_strided_slice %229 {offsets = [0, 0], sizes = [8, 128], strides = [1, 1]} : vector<8x256xf32> to vector<8x128xf32>
    %231 = vector.extract_strided_slice %230 {offsets = [0, 0], sizes = [8, 32], strides = [1, 1]} : vector<8x128xf32> to vector<8x32xf32>
    %cst_81 = arith.constant 0.000000e+00 : f32
    %232 = vector.broadcast %cst_81 : f32 to vector<8x32xf32>
    %233 = arith.subf %232, %231 : vector<8x32xf32>
    %234 = math.exp %233 : vector<8x32xf32>
    %cst_82 = arith.constant 1.000000e+00 : f32
    %235 = vector.broadcast %cst_82 : f32 to vector<8x32xf32>
    %236 = arith.addf %235, %234 : vector<8x32xf32>
    %cst_83 = arith.constant 1.000000e+00 : f32
    %237 = vector.broadcast %cst_83 : f32 to vector<8x32xf32>
    %238 = arith.divf %237, %236 : vector<8x32xf32>
    %239 = vector.extract_strided_slice %230 {offsets = [0, 32], sizes = [8, 32], strides = [1, 1]} : vector<8x128xf32> to vector<8x32xf32>
    %cst_84 = arith.constant 0.000000e+00 : f32
    %240 = vector.broadcast %cst_84 : f32 to vector<8x32xf32>
    %241 = arith.subf %240, %239 : vector<8x32xf32>
    %242 = math.exp %241 : vector<8x32xf32>
    %cst_85 = arith.constant 1.000000e+00 : f32
    %243 = vector.broadcast %cst_85 : f32 to vector<8x32xf32>
    %244 = arith.addf %243, %242 : vector<8x32xf32>
    %cst_86 = arith.constant 1.000000e+00 : f32
    %245 = vector.broadcast %cst_86 : f32 to vector<8x32xf32>
    %246 = arith.divf %245, %244 : vector<8x32xf32>
    %247 = vector.extract_strided_slice %230 {offsets = [0, 64], sizes = [8, 32], strides = [1, 1]} : vector<8x128xf32> to vector<8x32xf32>
    %248 = math.tanh %247 : vector<8x32xf32>
    %249 = vector.extract_strided_slice %230 {offsets = [0, 96], sizes = [8, 32], strides = [1, 1]} : vector<8x128xf32> to vector<8x32xf32>
    %cst_87 = arith.constant 0.000000e+00 : f32
    %250 = vector.broadcast %cst_87 : f32 to vector<8x32xf32>
    %251 = arith.subf %250, %249 : vector<8x32xf32>
    %252 = math.exp %251 : vector<8x32xf32>
    %cst_88 = arith.constant 1.000000e+00 : f32
    %253 = vector.broadcast %cst_88 : f32 to vector<8x32xf32>
    %254 = arith.addf %253, %252 : vector<8x32xf32>
    %cst_89 = arith.constant 1.000000e+00 : f32
    %255 = vector.broadcast %cst_89 : f32 to vector<8x32xf32>
    %256 = arith.divf %255, %254 : vector<8x32xf32>
    %257 = arith.mulf %246, %187 : vector<8x32xf32>
    %258 = arith.mulf %238, %248 : vector<8x32xf32>
    %259 = arith.addf %257, %258 : vector<8x32xf32>
    %260 = math.tanh %259 : vector<8x32xf32>
    %261 = arith.mulf %256, %260 : vector<8x32xf32>
    %262 = vector.extract_strided_slice %229 {offsets = [0, 128], sizes = [8, 128], strides = [1, 1]} : vector<8x256xf32> to vector<8x128xf32>
    %263 = vector.extract_strided_slice %262 {offsets = [0, 0], sizes = [8, 32], strides = [1, 1]} : vector<8x128xf32> to vector<8x32xf32>
    %cst_90 = arith.constant 0.000000e+00 : f32
    %264 = vector.broadcast %cst_90 : f32 to vector<8x32xf32>
    %265 = arith.subf %264, %263 : vector<8x32xf32>
    %266 = math.exp %265 : vector<8x32xf32>
    %cst_91 = arith.constant 1.000000e+00 : f32
    %267 = vector.broadcast %cst_91 : f32 to vector<8x32xf32>
    %268 = arith.addf %267, %266 : vector<8x32xf32>
    %cst_92 = arith.constant 1.000000e+00 : f32
    %269 = vector.broadcast %cst_92 : f32 to vector<8x32xf32>
    %270 = arith.divf %269, %268 : vector<8x32xf32>
    %271 = vector.extract_strided_slice %262 {offsets = [0, 32], sizes = [8, 32], strides = [1, 1]} : vector<8x128xf32> to vector<8x32xf32>
    %cst_93 = arith.constant 0.000000e+00 : f32
    %272 = vector.broadcast %cst_93 : f32 to vector<8x32xf32>
    %273 = arith.subf %272, %271 : vector<8x32xf32>
    %274 = math.exp %273 : vector<8x32xf32>
    %cst_94 = arith.constant 1.000000e+00 : f32
    %275 = vector.broadcast %cst_94 : f32 to vector<8x32xf32>
    %276 = arith.addf %275, %274 : vector<8x32xf32>
    %cst_95 = arith.constant 1.000000e+00 : f32
    %277 = vector.broadcast %cst_95 : f32 to vector<8x32xf32>
    %278 = arith.divf %277, %276 : vector<8x32xf32>
    %279 = vector.extract_strided_slice %262 {offsets = [0, 64], sizes = [8, 32], strides = [1, 1]} : vector<8x128xf32> to vector<8x32xf32>
    %280 = math.tanh %279 : vector<8x32xf32>
    %281 = vector.extract_strided_slice %262 {offsets = [0, 96], sizes = [8, 32], strides = [1, 1]} : vector<8x128xf32> to vector<8x32xf32>
    %cst_96 = arith.constant 0.000000e+00 : f32
    %282 = vector.broadcast %cst_96 : f32 to vector<8x32xf32>
    %283 = arith.subf %282, %281 : vector<8x32xf32>
    %284 = math.exp %283 : vector<8x32xf32>
    %cst_97 = arith.constant 1.000000e+00 : f32
    %285 = vector.broadcast %cst_97 : f32 to vector<8x32xf32>
    %286 = arith.addf %285, %284 : vector<8x32xf32>
    %cst_98 = arith.constant 1.000000e+00 : f32
    %287 = vector.broadcast %cst_98 : f32 to vector<8x32xf32>
    %288 = arith.divf %287, %286 : vector<8x32xf32>
    %289 = arith.mulf %278, %219 : vector<8x32xf32>
    %290 = arith.mulf %270, %280 : vector<8x32xf32>
    %291 = arith.addf %289, %290 : vector<8x32xf32>
    %292 = math.tanh %291 : vector<8x32xf32>
    %293 = arith.mulf %288, %292 : vector<8x32xf32>
    %c4_99 = arith.constant 4 : index
    %c0_100 = arith.constant 0 : index
    %c0_101 = arith.constant 0 : index
    %294 = vector.load %arg1[%c4_99, %c0_100, %c0_101] : memref<8x8x16xf32, #tpu.memory_space<vmem>>, vector<1x8x16xf32>
    %295 = vector.shape_cast %294 : vector<1x8x16xf32> to vector<8x16xf32>
    %c3_102 = arith.constant 3 : index
    %c0_103 = arith.constant 0 : index
    %c0_104 = arith.constant 0 : index
    %296 = vector.load %arg1[%c3_102, %c0_103, %c0_104] : memref<8x8x16xf32, #tpu.memory_space<vmem>>, vector<1x8x16xf32>
    %297 = vector.shape_cast %296 : vector<1x8x16xf32> to vector<8x16xf32>
    %298 = tpu.concatenate %295, %297, %261, %293 in 1 : vector<8x16xf32>, vector<8x16xf32>, vector<8x32xf32>, vector<8x32xf32> -> vector<8x96xf32>
    %cst_105 = arith.constant dense<0.000000e+00> : vector<8x256xf32>
    %299 = tpu.matmul %298, %0, %cst_105 {dimension_numbers = #tpu.dot_dimension_numbers<[1], [0], [0], [1], [0, 0, 1, 1], [], []>} : vector<8x96xf32>, vector<96x256xf32>, vector<8x256xf32> -> vector<8x256xf32>
    %300 = vector.broadcast %1 : vector<1x256xf32> to vector<8x256xf32>
    %301 = arith.addf %299, %300 : vector<8x256xf32>
    %302 = vector.extract_strided_slice %301 {offsets = [0, 0], sizes = [8, 128], strides = [1, 1]} : vector<8x256xf32> to vector<8x128xf32>
    %303 = vector.extract_strided_slice %302 {offsets = [0, 0], sizes = [8, 32], strides = [1, 1]} : vector<8x128xf32> to vector<8x32xf32>
    %cst_106 = arith.constant 0.000000e+00 : f32
    %304 = vector.broadcast %cst_106 : f32 to vector<8x32xf32>
    %305 = arith.subf %304, %303 : vector<8x32xf32>
    %306 = math.exp %305 : vector<8x32xf32>
    %cst_107 = arith.constant 1.000000e+00 : f32
    %307 = vector.broadcast %cst_107 : f32 to vector<8x32xf32>
    %308 = arith.addf %307, %306 : vector<8x32xf32>
    %cst_108 = arith.constant 1.000000e+00 : f32
    %309 = vector.broadcast %cst_108 : f32 to vector<8x32xf32>
    %310 = arith.divf %309, %308 : vector<8x32xf32>
    %311 = vector.extract_strided_slice %302 {offsets = [0, 32], sizes = [8, 32], strides = [1, 1]} : vector<8x128xf32> to vector<8x32xf32>
    %cst_109 = arith.constant 0.000000e+00 : f32
    %312 = vector.broadcast %cst_109 : f32 to vector<8x32xf32>
    %313 = arith.subf %312, %311 : vector<8x32xf32>
    %314 = math.exp %313 : vector<8x32xf32>
    %cst_110 = arith.constant 1.000000e+00 : f32
    %315 = vector.broadcast %cst_110 : f32 to vector<8x32xf32>
    %316 = arith.addf %315, %314 : vector<8x32xf32>
    %cst_111 = arith.constant 1.000000e+00 : f32
    %317 = vector.broadcast %cst_111 : f32 to vector<8x32xf32>
    %318 = arith.divf %317, %316 : vector<8x32xf32>
    %319 = vector.extract_strided_slice %302 {offsets = [0, 64], sizes = [8, 32], strides = [1, 1]} : vector<8x128xf32> to vector<8x32xf32>
    %320 = math.tanh %319 : vector<8x32xf32>
    %321 = vector.extract_strided_slice %302 {offsets = [0, 96], sizes = [8, 32], strides = [1, 1]} : vector<8x128xf32> to vector<8x32xf32>
    %cst_112 = arith.constant 0.000000e+00 : f32
    %322 = vector.broadcast %cst_112 : f32 to vector<8x32xf32>
    %323 = arith.subf %322, %321 : vector<8x32xf32>
    %324 = math.exp %323 : vector<8x32xf32>
    %cst_113 = arith.constant 1.000000e+00 : f32
    %325 = vector.broadcast %cst_113 : f32 to vector<8x32xf32>
    %326 = arith.addf %325, %324 : vector<8x32xf32>
    %cst_114 = arith.constant 1.000000e+00 : f32
    %327 = vector.broadcast %cst_114 : f32 to vector<8x32xf32>
    %328 = arith.divf %327, %326 : vector<8x32xf32>
    %329 = arith.mulf %318, %259 : vector<8x32xf32>
    %330 = arith.mulf %310, %320 : vector<8x32xf32>
    %331 = arith.addf %329, %330 : vector<8x32xf32>
    %332 = math.tanh %331 : vector<8x32xf32>
    %333 = arith.mulf %328, %332 : vector<8x32xf32>
    %334 = vector.extract_strided_slice %301 {offsets = [0, 128], sizes = [8, 128], strides = [1, 1]} : vector<8x256xf32> to vector<8x128xf32>
    %335 = vector.extract_strided_slice %334 {offsets = [0, 0], sizes = [8, 32], strides = [1, 1]} : vector<8x128xf32> to vector<8x32xf32>
    %cst_115 = arith.constant 0.000000e+00 : f32
    %336 = vector.broadcast %cst_115 : f32 to vector<8x32xf32>
    %337 = arith.subf %336, %335 : vector<8x32xf32>
    %338 = math.exp %337 : vector<8x32xf32>
    %cst_116 = arith.constant 1.000000e+00 : f32
    %339 = vector.broadcast %cst_116 : f32 to vector<8x32xf32>
    %340 = arith.addf %339, %338 : vector<8x32xf32>
    %cst_117 = arith.constant 1.000000e+00 : f32
    %341 = vector.broadcast %cst_117 : f32 to vector<8x32xf32>
    %342 = arith.divf %341, %340 : vector<8x32xf32>
    %343 = vector.extract_strided_slice %334 {offsets = [0, 32], sizes = [8, 32], strides = [1, 1]} : vector<8x128xf32> to vector<8x32xf32>
    %cst_118 = arith.constant 0.000000e+00 : f32
    %344 = vector.broadcast %cst_118 : f32 to vector<8x32xf32>
    %345 = arith.subf %344, %343 : vector<8x32xf32>
    %346 = math.exp %345 : vector<8x32xf32>
    %cst_119 = arith.constant 1.000000e+00 : f32
    %347 = vector.broadcast %cst_119 : f32 to vector<8x32xf32>
    %348 = arith.addf %347, %346 : vector<8x32xf32>
    %cst_120 = arith.constant 1.000000e+00 : f32
    %349 = vector.broadcast %cst_120 : f32 to vector<8x32xf32>
    %350 = arith.divf %349, %348 : vector<8x32xf32>
    %351 = vector.extract_strided_slice %334 {offsets = [0, 64], sizes = [8, 32], strides = [1, 1]} : vector<8x128xf32> to vector<8x32xf32>
    %352 = math.tanh %351 : vector<8x32xf32>
    %353 = vector.extract_strided_slice %334 {offsets = [0, 96], sizes = [8, 32], strides = [1, 1]} : vector<8x128xf32> to vector<8x32xf32>
    %cst_121 = arith.constant 0.000000e+00 : f32
    %354 = vector.broadcast %cst_121 : f32 to vector<8x32xf32>
    %355 = arith.subf %354, %353 : vector<8x32xf32>
    %356 = math.exp %355 : vector<8x32xf32>
    %cst_122 = arith.constant 1.000000e+00 : f32
    %357 = vector.broadcast %cst_122 : f32 to vector<8x32xf32>
    %358 = arith.addf %357, %356 : vector<8x32xf32>
    %cst_123 = arith.constant 1.000000e+00 : f32
    %359 = vector.broadcast %cst_123 : f32 to vector<8x32xf32>
    %360 = arith.divf %359, %358 : vector<8x32xf32>
    %361 = arith.mulf %350, %291 : vector<8x32xf32>
    %362 = arith.mulf %342, %352 : vector<8x32xf32>
    %363 = arith.addf %361, %362 : vector<8x32xf32>
    %364 = math.tanh %363 : vector<8x32xf32>
    %365 = arith.mulf %360, %364 : vector<8x32xf32>
    %c5_124 = arith.constant 5 : index
    %c0_125 = arith.constant 0 : index
    %c0_126 = arith.constant 0 : index
    %366 = vector.load %arg1[%c5_124, %c0_125, %c0_126] : memref<8x8x16xf32, #tpu.memory_space<vmem>>, vector<1x8x16xf32>
    %367 = vector.shape_cast %366 : vector<1x8x16xf32> to vector<8x16xf32>
    %c2_127 = arith.constant 2 : index
    %c0_128 = arith.constant 0 : index
    %c0_129 = arith.constant 0 : index
    %368 = vector.load %arg1[%c2_127, %c0_128, %c0_129] : memref<8x8x16xf32, #tpu.memory_space<vmem>>, vector<1x8x16xf32>
    %369 = vector.shape_cast %368 : vector<1x8x16xf32> to vector<8x16xf32>
    %370 = tpu.concatenate %367, %369, %333, %365 in 1 : vector<8x16xf32>, vector<8x16xf32>, vector<8x32xf32>, vector<8x32xf32> -> vector<8x96xf32>
    %cst_130 = arith.constant dense<0.000000e+00> : vector<8x256xf32>
    %371 = tpu.matmul %370, %0, %cst_130 {dimension_numbers = #tpu.dot_dimension_numbers<[1], [0], [0], [1], [0, 0, 1, 1], [], []>} : vector<8x96xf32>, vector<96x256xf32>, vector<8x256xf32> -> vector<8x256xf32>
    %372 = vector.broadcast %1 : vector<1x256xf32> to vector<8x256xf32>
    %373 = arith.addf %371, %372 : vector<8x256xf32>
    %374 = vector.extract_strided_slice %373 {offsets = [0, 0], sizes = [8, 128], strides = [1, 1]} : vector<8x256xf32> to vector<8x128xf32>
    %375 = vector.extract_strided_slice %374 {offsets = [0, 0], sizes = [8, 32], strides = [1, 1]} : vector<8x128xf32> to vector<8x32xf32>
    %cst_131 = arith.constant 0.000000e+00 : f32
    %376 = vector.broadcast %cst_131 : f32 to vector<8x32xf32>
    %377 = arith.subf %376, %375 : vector<8x32xf32>
    %378 = math.exp %377 : vector<8x32xf32>
    %cst_132 = arith.constant 1.000000e+00 : f32
    %379 = vector.broadcast %cst_132 : f32 to vector<8x32xf32>
    %380 = arith.addf %379, %378 : vector<8x32xf32>
    %cst_133 = arith.constant 1.000000e+00 : f32
    %381 = vector.broadcast %cst_133 : f32 to vector<8x32xf32>
    %382 = arith.divf %381, %380 : vector<8x32xf32>
    %383 = vector.extract_strided_slice %374 {offsets = [0, 32], sizes = [8, 32], strides = [1, 1]} : vector<8x128xf32> to vector<8x32xf32>
    %cst_134 = arith.constant 0.000000e+00 : f32
    %384 = vector.broadcast %cst_134 : f32 to vector<8x32xf32>
    %385 = arith.subf %384, %383 : vector<8x32xf32>
    %386 = math.exp %385 : vector<8x32xf32>
    %cst_135 = arith.constant 1.000000e+00 : f32
    %387 = vector.broadcast %cst_135 : f32 to vector<8x32xf32>
    %388 = arith.addf %387, %386 : vector<8x32xf32>
    %cst_136 = arith.constant 1.000000e+00 : f32
    %389 = vector.broadcast %cst_136 : f32 to vector<8x32xf32>
    %390 = arith.divf %389, %388 : vector<8x32xf32>
    %391 = vector.extract_strided_slice %374 {offsets = [0, 64], sizes = [8, 32], strides = [1, 1]} : vector<8x128xf32> to vector<8x32xf32>
    %392 = math.tanh %391 : vector<8x32xf32>
    %393 = vector.extract_strided_slice %374 {offsets = [0, 96], sizes = [8, 32], strides = [1, 1]} : vector<8x128xf32> to vector<8x32xf32>
    %cst_137 = arith.constant 0.000000e+00 : f32
    %394 = vector.broadcast %cst_137 : f32 to vector<8x32xf32>
    %395 = arith.subf %394, %393 : vector<8x32xf32>
    %396 = math.exp %395 : vector<8x32xf32>
    %cst_138 = arith.constant 1.000000e+00 : f32
    %397 = vector.broadcast %cst_138 : f32 to vector<8x32xf32>
    %398 = arith.addf %397, %396 : vector<8x32xf32>
    %cst_139 = arith.constant 1.000000e+00 : f32
    %399 = vector.broadcast %cst_139 : f32 to vector<8x32xf32>
    %400 = arith.divf %399, %398 : vector<8x32xf32>
    %401 = arith.mulf %390, %331 : vector<8x32xf32>
    %402 = arith.mulf %382, %392 : vector<8x32xf32>
    %403 = arith.addf %401, %402 : vector<8x32xf32>
    %404 = math.tanh %403 : vector<8x32xf32>
    %405 = arith.mulf %400, %404 : vector<8x32xf32>
    %406 = vector.extract_strided_slice %373 {offsets = [0, 128], sizes = [8, 128], strides = [1, 1]} : vector<8x256xf32> to vector<8x128xf32>
    %407 = vector.extract_strided_slice %406 {offsets = [0, 0], sizes = [8, 32], strides = [1, 1]} : vector<8x128xf32> to vector<8x32xf32>
    %cst_140 = arith.constant 0.000000e+00 : f32
    %408 = vector.broadcast %cst_140 : f32 to vector<8x32xf32>
    %409 = arith.subf %408, %407 : vector<8x32xf32>
    %410 = math.exp %409 : vector<8x32xf32>
    %cst_141 = arith.constant 1.000000e+00 : f32
    %411 = vector.broadcast %cst_141 : f32 to vector<8x32xf32>
    %412 = arith.addf %411, %410 : vector<8x32xf32>
    %cst_142 = arith.constant 1.000000e+00 : f32
    %413 = vector.broadcast %cst_142 : f32 to vector<8x32xf32>
    %414 = arith.divf %413, %412 : vector<8x32xf32>
    %415 = vector.extract_strided_slice %406 {offsets = [0, 32], sizes = [8, 32], strides = [1, 1]} : vector<8x128xf32> to vector<8x32xf32>
    %cst_143 = arith.constant 0.000000e+00 : f32
    %416 = vector.broadcast %cst_143 : f32 to vector<8x32xf32>
    %417 = arith.subf %416, %415 : vector<8x32xf32>
    %418 = math.exp %417 : vector<8x32xf32>
    %cst_144 = arith.constant 1.000000e+00 : f32
    %419 = vector.broadcast %cst_144 : f32 to vector<8x32xf32>
    %420 = arith.addf %419, %418 : vector<8x32xf32>
    %cst_145 = arith.constant 1.000000e+00 : f32
    %421 = vector.broadcast %cst_145 : f32 to vector<8x32xf32>
    %422 = arith.divf %421, %420 : vector<8x32xf32>
    %423 = vector.extract_strided_slice %406 {offsets = [0, 64], sizes = [8, 32], strides = [1, 1]} : vector<8x128xf32> to vector<8x32xf32>
    %424 = math.tanh %423 : vector<8x32xf32>
    %425 = vector.extract_strided_slice %406 {offsets = [0, 96], sizes = [8, 32], strides = [1, 1]} : vector<8x128xf32> to vector<8x32xf32>
    %cst_146 = arith.constant 0.000000e+00 : f32
    %426 = vector.broadcast %cst_146 : f32 to vector<8x32xf32>
    %427 = arith.subf %426, %425 : vector<8x32xf32>
    %428 = math.exp %427 : vector<8x32xf32>
    %cst_147 = arith.constant 1.000000e+00 : f32
    %429 = vector.broadcast %cst_147 : f32 to vector<8x32xf32>
    %430 = arith.addf %429, %428 : vector<8x32xf32>
    %cst_148 = arith.constant 1.000000e+00 : f32
    %431 = vector.broadcast %cst_148 : f32 to vector<8x32xf32>
    %432 = arith.divf %431, %430 : vector<8x32xf32>
    %433 = arith.mulf %422, %363 : vector<8x32xf32>
    %434 = arith.mulf %414, %424 : vector<8x32xf32>
    %435 = arith.addf %433, %434 : vector<8x32xf32>
    %436 = math.tanh %435 : vector<8x32xf32>
    %437 = arith.mulf %432, %436 : vector<8x32xf32>
    %c6_149 = arith.constant 6 : index
    %c0_150 = arith.constant 0 : index
    %c0_151 = arith.constant 0 : index
    %438 = vector.load %arg1[%c6_149, %c0_150, %c0_151] : memref<8x8x16xf32, #tpu.memory_space<vmem>>, vector<1x8x16xf32>
    %439 = vector.shape_cast %438 : vector<1x8x16xf32> to vector<8x16xf32>
    %c1_152 = arith.constant 1 : index
    %c0_153 = arith.constant 0 : index
    %c0_154 = arith.constant 0 : index
    %440 = vector.load %arg1[%c1_152, %c0_153, %c0_154] : memref<8x8x16xf32, #tpu.memory_space<vmem>>, vector<1x8x16xf32>
    %441 = vector.shape_cast %440 : vector<1x8x16xf32> to vector<8x16xf32>
    %442 = tpu.concatenate %439, %441, %405, %437 in 1 : vector<8x16xf32>, vector<8x16xf32>, vector<8x32xf32>, vector<8x32xf32> -> vector<8x96xf32>
    %cst_155 = arith.constant dense<0.000000e+00> : vector<8x256xf32>
    %443 = tpu.matmul %442, %0, %cst_155 {dimension_numbers = #tpu.dot_dimension_numbers<[1], [0], [0], [1], [0, 0, 1, 1], [], []>} : vector<8x96xf32>, vector<96x256xf32>, vector<8x256xf32> -> vector<8x256xf32>
    %444 = vector.broadcast %1 : vector<1x256xf32> to vector<8x256xf32>
    %445 = arith.addf %443, %444 : vector<8x256xf32>
    %446 = vector.extract_strided_slice %445 {offsets = [0, 0], sizes = [8, 128], strides = [1, 1]} : vector<8x256xf32> to vector<8x128xf32>
    %447 = vector.extract_strided_slice %446 {offsets = [0, 0], sizes = [8, 32], strides = [1, 1]} : vector<8x128xf32> to vector<8x32xf32>
    %cst_156 = arith.constant 0.000000e+00 : f32
    %448 = vector.broadcast %cst_156 : f32 to vector<8x32xf32>
    %449 = arith.subf %448, %447 : vector<8x32xf32>
    %450 = math.exp %449 : vector<8x32xf32>
    %cst_157 = arith.constant 1.000000e+00 : f32
    %451 = vector.broadcast %cst_157 : f32 to vector<8x32xf32>
    %452 = arith.addf %451, %450 : vector<8x32xf32>
    %cst_158 = arith.constant 1.000000e+00 : f32
    %453 = vector.broadcast %cst_158 : f32 to vector<8x32xf32>
    %454 = arith.divf %453, %452 : vector<8x32xf32>
    %455 = vector.extract_strided_slice %446 {offsets = [0, 32], sizes = [8, 32], strides = [1, 1]} : vector<8x128xf32> to vector<8x32xf32>
    %cst_159 = arith.constant 0.000000e+00 : f32
    %456 = vector.broadcast %cst_159 : f32 to vector<8x32xf32>
    %457 = arith.subf %456, %455 : vector<8x32xf32>
    %458 = math.exp %457 : vector<8x32xf32>
    %cst_160 = arith.constant 1.000000e+00 : f32
    %459 = vector.broadcast %cst_160 : f32 to vector<8x32xf32>
    %460 = arith.addf %459, %458 : vector<8x32xf32>
    %cst_161 = arith.constant 1.000000e+00 : f32
    %461 = vector.broadcast %cst_161 : f32 to vector<8x32xf32>
    %462 = arith.divf %461, %460 : vector<8x32xf32>
    %463 = vector.extract_strided_slice %446 {offsets = [0, 64], sizes = [8, 32], strides = [1, 1]} : vector<8x128xf32> to vector<8x32xf32>
    %464 = math.tanh %463 : vector<8x32xf32>
    %465 = vector.extract_strided_slice %446 {offsets = [0, 96], sizes = [8, 32], strides = [1, 1]} : vector<8x128xf32> to vector<8x32xf32>
    %cst_162 = arith.constant 0.000000e+00 : f32
    %466 = vector.broadcast %cst_162 : f32 to vector<8x32xf32>
    %467 = arith.subf %466, %465 : vector<8x32xf32>
    %468 = math.exp %467 : vector<8x32xf32>
    %cst_163 = arith.constant 1.000000e+00 : f32
    %469 = vector.broadcast %cst_163 : f32 to vector<8x32xf32>
    %470 = arith.addf %469, %468 : vector<8x32xf32>
    %cst_164 = arith.constant 1.000000e+00 : f32
    %471 = vector.broadcast %cst_164 : f32 to vector<8x32xf32>
    %472 = arith.divf %471, %470 : vector<8x32xf32>
    %473 = arith.mulf %462, %403 : vector<8x32xf32>
    %474 = arith.mulf %454, %464 : vector<8x32xf32>
    %475 = arith.addf %473, %474 : vector<8x32xf32>
    %476 = math.tanh %475 : vector<8x32xf32>
    %477 = arith.mulf %472, %476 : vector<8x32xf32>
    %478 = vector.extract_strided_slice %445 {offsets = [0, 128], sizes = [8, 128], strides = [1, 1]} : vector<8x256xf32> to vector<8x128xf32>
    %479 = vector.extract_strided_slice %478 {offsets = [0, 0], sizes = [8, 32], strides = [1, 1]} : vector<8x128xf32> to vector<8x32xf32>
    %cst_165 = arith.constant 0.000000e+00 : f32
    %480 = vector.broadcast %cst_165 : f32 to vector<8x32xf32>
    %481 = arith.subf %480, %479 : vector<8x32xf32>
    %482 = math.exp %481 : vector<8x32xf32>
    %cst_166 = arith.constant 1.000000e+00 : f32
    %483 = vector.broadcast %cst_166 : f32 to vector<8x32xf32>
    %484 = arith.addf %483, %482 : vector<8x32xf32>
    %cst_167 = arith.constant 1.000000e+00 : f32
    %485 = vector.broadcast %cst_167 : f32 to vector<8x32xf32>
    %486 = arith.divf %485, %484 : vector<8x32xf32>
    %487 = vector.extract_strided_slice %478 {offsets = [0, 32], sizes = [8, 32], strides = [1, 1]} : vector<8x128xf32> to vector<8x32xf32>
    %cst_168 = arith.constant 0.000000e+00 : f32
    %488 = vector.broadcast %cst_168 : f32 to vector<8x32xf32>
    %489 = arith.subf %488, %487 : vector<8x32xf32>
    %490 = math.exp %489 : vector<8x32xf32>
    %cst_169 = arith.constant 1.000000e+00 : f32
    %491 = vector.broadcast %cst_169 : f32 to vector<8x32xf32>
    %492 = arith.addf %491, %490 : vector<8x32xf32>
    %cst_170 = arith.constant 1.000000e+00 : f32
    %493 = vector.broadcast %cst_170 : f32 to vector<8x32xf32>
    %494 = arith.divf %493, %492 : vector<8x32xf32>
    %495 = vector.extract_strided_slice %478 {offsets = [0, 64], sizes = [8, 32], strides = [1, 1]} : vector<8x128xf32> to vector<8x32xf32>
    %496 = math.tanh %495 : vector<8x32xf32>
    %497 = vector.extract_strided_slice %478 {offsets = [0, 96], sizes = [8, 32], strides = [1, 1]} : vector<8x128xf32> to vector<8x32xf32>
    %cst_171 = arith.constant 0.000000e+00 : f32
    %498 = vector.broadcast %cst_171 : f32 to vector<8x32xf32>
    %499 = arith.subf %498, %497 : vector<8x32xf32>
    %500 = math.exp %499 : vector<8x32xf32>
    %cst_172 = arith.constant 1.000000e+00 : f32
    %501 = vector.broadcast %cst_172 : f32 to vector<8x32xf32>
    %502 = arith.addf %501, %500 : vector<8x32xf32>
    %cst_173 = arith.constant 1.000000e+00 : f32
    %503 = vector.broadcast %cst_173 : f32 to vector<8x32xf32>
    %504 = arith.divf %503, %502 : vector<8x32xf32>
    %505 = arith.mulf %494, %435 : vector<8x32xf32>
    %506 = arith.mulf %486, %496 : vector<8x32xf32>
    %507 = arith.addf %505, %506 : vector<8x32xf32>
    %508 = math.tanh %507 : vector<8x32xf32>
    %509 = arith.mulf %504, %508 : vector<8x32xf32>
    %c7_174 = arith.constant 7 : index
    %c0_175 = arith.constant 0 : index
    %c0_176 = arith.constant 0 : index
    %510 = vector.load %arg1[%c7_174, %c0_175, %c0_176] : memref<8x8x16xf32, #tpu.memory_space<vmem>>, vector<1x8x16xf32>
    %511 = vector.shape_cast %510 : vector<1x8x16xf32> to vector<8x16xf32>
    %c0_177 = arith.constant 0 : index
    %c0_178 = arith.constant 0 : index
    %c0_179 = arith.constant 0 : index
    %512 = vector.load %arg1[%c0_177, %c0_178, %c0_179] : memref<8x8x16xf32, #tpu.memory_space<vmem>>, vector<1x8x16xf32>
    %513 = vector.shape_cast %512 : vector<1x8x16xf32> to vector<8x16xf32>
    %514 = tpu.concatenate %511, %513, %477, %509 in 1 : vector<8x16xf32>, vector<8x16xf32>, vector<8x32xf32>, vector<8x32xf32> -> vector<8x96xf32>
    %cst_180 = arith.constant dense<0.000000e+00> : vector<8x256xf32>
    %515 = tpu.matmul %514, %0, %cst_180 {dimension_numbers = #tpu.dot_dimension_numbers<[1], [0], [0], [1], [0, 0, 1, 1], [], []>} : vector<8x96xf32>, vector<96x256xf32>, vector<8x256xf32> -> vector<8x256xf32>
    %516 = vector.broadcast %1 : vector<1x256xf32> to vector<8x256xf32>
    %517 = arith.addf %515, %516 : vector<8x256xf32>
    %518 = vector.extract_strided_slice %517 {offsets = [0, 0], sizes = [8, 128], strides = [1, 1]} : vector<8x256xf32> to vector<8x128xf32>
    %519 = vector.extract_strided_slice %518 {offsets = [0, 0], sizes = [8, 32], strides = [1, 1]} : vector<8x128xf32> to vector<8x32xf32>
    %cst_181 = arith.constant 0.000000e+00 : f32
    %520 = vector.broadcast %cst_181 : f32 to vector<8x32xf32>
    %521 = arith.subf %520, %519 : vector<8x32xf32>
    %522 = math.exp %521 : vector<8x32xf32>
    %cst_182 = arith.constant 1.000000e+00 : f32
    %523 = vector.broadcast %cst_182 : f32 to vector<8x32xf32>
    %524 = arith.addf %523, %522 : vector<8x32xf32>
    %cst_183 = arith.constant 1.000000e+00 : f32
    %525 = vector.broadcast %cst_183 : f32 to vector<8x32xf32>
    %526 = arith.divf %525, %524 : vector<8x32xf32>
    %527 = vector.extract_strided_slice %518 {offsets = [0, 32], sizes = [8, 32], strides = [1, 1]} : vector<8x128xf32> to vector<8x32xf32>
    %cst_184 = arith.constant 0.000000e+00 : f32
    %528 = vector.broadcast %cst_184 : f32 to vector<8x32xf32>
    %529 = arith.subf %528, %527 : vector<8x32xf32>
    %530 = math.exp %529 : vector<8x32xf32>
    %cst_185 = arith.constant 1.000000e+00 : f32
    %531 = vector.broadcast %cst_185 : f32 to vector<8x32xf32>
    %532 = arith.addf %531, %530 : vector<8x32xf32>
    %cst_186 = arith.constant 1.000000e+00 : f32
    %533 = vector.broadcast %cst_186 : f32 to vector<8x32xf32>
    %534 = arith.divf %533, %532 : vector<8x32xf32>
    %535 = vector.extract_strided_slice %518 {offsets = [0, 64], sizes = [8, 32], strides = [1, 1]} : vector<8x128xf32> to vector<8x32xf32>
    %536 = math.tanh %535 : vector<8x32xf32>
    %537 = vector.extract_strided_slice %518 {offsets = [0, 96], sizes = [8, 32], strides = [1, 1]} : vector<8x128xf32> to vector<8x32xf32>
    %cst_187 = arith.constant 0.000000e+00 : f32
    %538 = vector.broadcast %cst_187 : f32 to vector<8x32xf32>
    %539 = arith.subf %538, %537 : vector<8x32xf32>
    %540 = math.exp %539 : vector<8x32xf32>
    %cst_188 = arith.constant 1.000000e+00 : f32
    %541 = vector.broadcast %cst_188 : f32 to vector<8x32xf32>
    %542 = arith.addf %541, %540 : vector<8x32xf32>
    %cst_189 = arith.constant 1.000000e+00 : f32
    %543 = vector.broadcast %cst_189 : f32 to vector<8x32xf32>
    %544 = arith.divf %543, %542 : vector<8x32xf32>
    %545 = arith.mulf %534, %475 : vector<8x32xf32>
    %546 = arith.mulf %526, %536 : vector<8x32xf32>
    %547 = arith.addf %545, %546 : vector<8x32xf32>
    %548 = math.tanh %547 : vector<8x32xf32>
    %549 = arith.mulf %544, %548 : vector<8x32xf32>
    %550 = vector.extract_strided_slice %517 {offsets = [0, 128], sizes = [8, 128], strides = [1, 1]} : vector<8x256xf32> to vector<8x128xf32>
    %551 = vector.extract_strided_slice %550 {offsets = [0, 0], sizes = [8, 32], strides = [1, 1]} : vector<8x128xf32> to vector<8x32xf32>
    %cst_190 = arith.constant 0.000000e+00 : f32
    %552 = vector.broadcast %cst_190 : f32 to vector<8x32xf32>
    %553 = arith.subf %552, %551 : vector<8x32xf32>
    %554 = math.exp %553 : vector<8x32xf32>
    %cst_191 = arith.constant 1.000000e+00 : f32
    %555 = vector.broadcast %cst_191 : f32 to vector<8x32xf32>
    %556 = arith.addf %555, %554 : vector<8x32xf32>
    %cst_192 = arith.constant 1.000000e+00 : f32
    %557 = vector.broadcast %cst_192 : f32 to vector<8x32xf32>
    %558 = arith.divf %557, %556 : vector<8x32xf32>
    %559 = vector.extract_strided_slice %550 {offsets = [0, 32], sizes = [8, 32], strides = [1, 1]} : vector<8x128xf32> to vector<8x32xf32>
    %cst_193 = arith.constant 0.000000e+00 : f32
    %560 = vector.broadcast %cst_193 : f32 to vector<8x32xf32>
    %561 = arith.subf %560, %559 : vector<8x32xf32>
    %562 = math.exp %561 : vector<8x32xf32>
    %cst_194 = arith.constant 1.000000e+00 : f32
    %563 = vector.broadcast %cst_194 : f32 to vector<8x32xf32>
    %564 = arith.addf %563, %562 : vector<8x32xf32>
    %cst_195 = arith.constant 1.000000e+00 : f32
    %565 = vector.broadcast %cst_195 : f32 to vector<8x32xf32>
    %566 = arith.divf %565, %564 : vector<8x32xf32>
    %567 = vector.extract_strided_slice %550 {offsets = [0, 64], sizes = [8, 32], strides = [1, 1]} : vector<8x128xf32> to vector<8x32xf32>
    %568 = math.tanh %567 : vector<8x32xf32>
    %569 = vector.extract_strided_slice %550 {offsets = [0, 96], sizes = [8, 32], strides = [1, 1]} : vector<8x128xf32> to vector<8x32xf32>
    %cst_196 = arith.constant 0.000000e+00 : f32
    %570 = vector.broadcast %cst_196 : f32 to vector<8x32xf32>
    %571 = arith.subf %570, %569 : vector<8x32xf32>
    %572 = math.exp %571 : vector<8x32xf32>
    %cst_197 = arith.constant 1.000000e+00 : f32
    %573 = vector.broadcast %cst_197 : f32 to vector<8x32xf32>
    %574 = arith.addf %573, %572 : vector<8x32xf32>
    %cst_198 = arith.constant 1.000000e+00 : f32
    %575 = vector.broadcast %cst_198 : f32 to vector<8x32xf32>
    %576 = arith.divf %575, %574 : vector<8x32xf32>
    %577 = arith.mulf %566, %507 : vector<8x32xf32>
    %578 = arith.mulf %558, %568 : vector<8x32xf32>
    %579 = arith.addf %577, %578 : vector<8x32xf32>
    %580 = math.tanh %579 : vector<8x32xf32>
    %581 = arith.mulf %576, %580 : vector<8x32xf32>
    %c0_199 = arith.constant 0 : index
    %c0_200 = arith.constant 0 : index
    %582 = vector.load %arg4[%c0_199, %c0_200] : memref<1x64xf32, #tpu.memory_space<vmem>>, vector<1x64xf32>
    %583 = tpu.concatenate %45, %581 in 1 : vector<8x32xf32>, vector<8x32xf32> -> vector<8x64xf32>
    %584 = vector.broadcast %582 : vector<1x64xf32> to vector<8x64xf32>
    %585 = arith.mulf %583, %584 : vector<8x64xf32>
    %cst_201 = arith.constant dense<0.000000e+00> : vector<8xf32>
    %586 = vector.multi_reduction <add>, %585, %cst_201 [1] : vector<8x64xf32> to vector<8xf32>
    %587 = vector.shape_cast %586 : vector<8xf32> to vector<8x1xf32>
    %588 = tpu.concatenate %117, %509 in 1 : vector<8x32xf32>, vector<8x32xf32> -> vector<8x64xf32>
    %589 = vector.broadcast %582 : vector<1x64xf32> to vector<8x64xf32>
    %590 = arith.mulf %588, %589 : vector<8x64xf32>
    %cst_202 = arith.constant dense<0.000000e+00> : vector<8xf32>
    %591 = vector.multi_reduction <add>, %590, %cst_202 [1] : vector<8x64xf32> to vector<8xf32>
    %592 = vector.shape_cast %591 : vector<8xf32> to vector<8x1xf32>
    %593 = tpu.concatenate %189, %437 in 1 : vector<8x32xf32>, vector<8x32xf32> -> vector<8x64xf32>
    %594 = vector.broadcast %582 : vector<1x64xf32> to vector<8x64xf32>
    %595 = arith.mulf %593, %594 : vector<8x64xf32>
    %cst_203 = arith.constant dense<0.000000e+00> : vector<8xf32>
    %596 = vector.multi_reduction <add>, %595, %cst_203 [1] : vector<8x64xf32> to vector<8xf32>
    %597 = vector.shape_cast %596 : vector<8xf32> to vector<8x1xf32>
    %598 = tpu.concatenate %261, %365 in 1 : vector<8x32xf32>, vector<8x32xf32> -> vector<8x64xf32>
    %599 = vector.broadcast %582 : vector<1x64xf32> to vector<8x64xf32>
    %600 = arith.mulf %598, %599 : vector<8x64xf32>
    %cst_204 = arith.constant dense<0.000000e+00> : vector<8xf32>
    %601 = vector.multi_reduction <add>, %600, %cst_204 [1] : vector<8x64xf32> to vector<8xf32>
    %602 = vector.shape_cast %601 : vector<8xf32> to vector<8x1xf32>
    %603 = tpu.concatenate %333, %293 in 1 : vector<8x32xf32>, vector<8x32xf32> -> vector<8x64xf32>
    %604 = vector.broadcast %582 : vector<1x64xf32> to vector<8x64xf32>
    %605 = arith.mulf %603, %604 : vector<8x64xf32>
    %cst_205 = arith.constant dense<0.000000e+00> : vector<8xf32>
    %606 = vector.multi_reduction <add>, %605, %cst_205 [1] : vector<8x64xf32> to vector<8xf32>
    %607 = vector.shape_cast %606 : vector<8xf32> to vector<8x1xf32>
    %608 = tpu.concatenate %405, %221 in 1 : vector<8x32xf32>, vector<8x32xf32> -> vector<8x64xf32>
    %609 = vector.broadcast %582 : vector<1x64xf32> to vector<8x64xf32>
    %610 = arith.mulf %608, %609 : vector<8x64xf32>
    %cst_206 = arith.constant dense<0.000000e+00> : vector<8xf32>
    %611 = vector.multi_reduction <add>, %610, %cst_206 [1] : vector<8x64xf32> to vector<8xf32>
    %612 = vector.shape_cast %611 : vector<8xf32> to vector<8x1xf32>
    %613 = tpu.concatenate %477, %149 in 1 : vector<8x32xf32>, vector<8x32xf32> -> vector<8x64xf32>
    %614 = vector.broadcast %582 : vector<1x64xf32> to vector<8x64xf32>
    %615 = arith.mulf %613, %614 : vector<8x64xf32>
    %cst_207 = arith.constant dense<0.000000e+00> : vector<8xf32>
    %616 = vector.multi_reduction <add>, %615, %cst_207 [1] : vector<8x64xf32> to vector<8xf32>
    %617 = vector.shape_cast %616 : vector<8xf32> to vector<8x1xf32>
    %618 = tpu.concatenate %549, %77 in 1 : vector<8x32xf32>, vector<8x32xf32> -> vector<8x64xf32>
    %619 = vector.broadcast %582 : vector<1x64xf32> to vector<8x64xf32>
    %620 = arith.mulf %618, %619 : vector<8x64xf32>
    %cst_208 = arith.constant dense<0.000000e+00> : vector<8xf32>
    %621 = vector.multi_reduction <add>, %620, %cst_208 [1] : vector<8x64xf32> to vector<8xf32>
    %622 = vector.shape_cast %621 : vector<8xf32> to vector<8x1xf32>
    %623 = tpu.concatenate %587, %592, %597, %602, %607, %612, %617, %622 in 1 : vector<8x1xf32>, vector<8x1xf32>, vector<8x1xf32>, vector<8x1xf32>, vector<8x1xf32>, vector<8x1xf32>, vector<8x1xf32>, vector<8x1xf32> -> vector<8x8xf32>
    %cst_209 = arith.constant dense<0xFF800000> : vector<8xf32>
    %624 = vector.multi_reduction <maximumf>, %623, %cst_209 [1] : vector<8x8xf32> to vector<8xf32>
    %625 = vector.shape_cast %624 : vector<8xf32> to vector<8x1xf32>
    %626 = vector.broadcast %625 : vector<8x1xf32> to vector<8x8xf32>
    %627 = arith.subf %623, %626 : vector<8x8xf32>
    %628 = math.exp %627 : vector<8x8xf32>
    %cst_210 = arith.constant dense<0.000000e+00> : vector<8xf32>
    %629 = vector.multi_reduction <add>, %628, %cst_210 [1] : vector<8x8xf32> to vector<8xf32>
    %630 = vector.shape_cast %629 : vector<8xf32> to vector<8x1xf32>
    %631 = vector.broadcast %630 : vector<8x1xf32> to vector<8x8xf32>
    %632 = arith.divf %628, %631 : vector<8x8xf32>
    %cst_211 = arith.constant 0.000000e+00 : f32
    %633 = vector.broadcast %cst_211 : f32 to vector<8x64xf32>
    %634 = vector.extract_strided_slice %632 {offsets = [0, 0], sizes = [8, 1], strides = [1, 1]} : vector<8x8xf32> to vector<8x1xf32>
    %635 = vector.broadcast %634 : vector<8x1xf32> to vector<8x64xf32>
    %636 = arith.mulf %583, %635 : vector<8x64xf32>
    %637 = arith.addf %633, %636 : vector<8x64xf32>
    %638 = vector.extract_strided_slice %632 {offsets = [0, 1], sizes = [8, 1], strides = [1, 1]} : vector<8x8xf32> to vector<8x1xf32>
    %639 = vector.broadcast %638 : vector<8x1xf32> to vector<8x64xf32>
    %640 = arith.mulf %588, %639 : vector<8x64xf32>
    %641 = arith.addf %637, %640 : vector<8x64xf32>
    %642 = vector.extract_strided_slice %632 {offsets = [0, 2], sizes = [8, 1], strides = [1, 1]} : vector<8x8xf32> to vector<8x1xf32>
    %643 = vector.broadcast %642 : vector<8x1xf32> to vector<8x64xf32>
    %644 = arith.mulf %593, %643 : vector<8x64xf32>
    %645 = arith.addf %641, %644 : vector<8x64xf32>
    %646 = vector.extract_strided_slice %632 {offsets = [0, 3], sizes = [8, 1], strides = [1, 1]} : vector<8x8xf32> to vector<8x1xf32>
    %647 = vector.broadcast %646 : vector<8x1xf32> to vector<8x64xf32>
    %648 = arith.mulf %598, %647 : vector<8x64xf32>
    %649 = arith.addf %645, %648 : vector<8x64xf32>
    %650 = vector.extract_strided_slice %632 {offsets = [0, 4], sizes = [8, 1], strides = [1, 1]} : vector<8x8xf32> to vector<8x1xf32>
    %651 = vector.broadcast %650 : vector<8x1xf32> to vector<8x64xf32>
    %652 = arith.mulf %603, %651 : vector<8x64xf32>
    %653 = arith.addf %649, %652 : vector<8x64xf32>
    %654 = vector.extract_strided_slice %632 {offsets = [0, 5], sizes = [8, 1], strides = [1, 1]} : vector<8x8xf32> to vector<8x1xf32>
    %655 = vector.broadcast %654 : vector<8x1xf32> to vector<8x64xf32>
    %656 = arith.mulf %608, %655 : vector<8x64xf32>
    %657 = arith.addf %653, %656 : vector<8x64xf32>
    %658 = vector.extract_strided_slice %632 {offsets = [0, 6], sizes = [8, 1], strides = [1, 1]} : vector<8x8xf32> to vector<8x1xf32>
    %659 = vector.broadcast %658 : vector<8x1xf32> to vector<8x64xf32>
    %660 = arith.mulf %613, %659 : vector<8x64xf32>
    %661 = arith.addf %657, %660 : vector<8x64xf32>
    %662 = vector.extract_strided_slice %632 {offsets = [0, 7], sizes = [8, 1], strides = [1, 1]} : vector<8x8xf32> to vector<8x1xf32>
    %663 = vector.broadcast %662 : vector<8x1xf32> to vector<8x64xf32>
    %664 = arith.mulf %618, %663 : vector<8x64xf32>
    %665 = arith.addf %661, %664 : vector<8x64xf32>
    %c0_212 = arith.constant 0 : index
    %c0_213 = arith.constant 0 : index
    %666 = vector.load %arg5[%c0_212, %c0_213] : memref<64x2xf32, #tpu.memory_space<vmem>>, vector<64x2xf32>
    %cst_214 = arith.constant dense<0.000000e+00> : vector<8x2xf32>
    %667 = tpu.matmul %665, %666, %cst_214 {dimension_numbers = #tpu.dot_dimension_numbers<[1], [0], [0], [1], [0, 0, 1, 1], [], []>} : vector<8x64xf32>, vector<64x2xf32>, vector<8x2xf32> -> vector<8x2xf32>
    %c0_215 = arith.constant 0 : index
    %c0_216 = arith.constant 0 : index
    %668 = vector.load %arg6[%c0_215, %c0_216] : memref<1x2xf32, #tpu.memory_space<vmem>>, vector<1x2xf32>
    %669 = vector.broadcast %668 : vector<1x2xf32> to vector<8x2xf32>
    %670 = arith.addf %667, %669 : vector<8x2xf32>
    %c0_217 = arith.constant 0 : index
    %c0_218 = arith.constant 0 : index
    %671 = vector.load %arg7[%c0_217, %c0_218] : memref<8x2xf32, #tpu.memory_space<vmem>>, vector<8x2xf32>
    tpu.vector_store %arg7[%c0_217, %c0_218], %670 {strides = array<i32>} : memref<8x2xf32, #tpu.memory_space<vmem>>, vector<8x2xf32>,
    return
  }
  func.func @transform_0(%arg0: i32) -> (i32, i32, i32) {
    %c0_i32 = arith.constant 0 : i32
    %c0_i32_0 = arith.constant 0 : i32
    %c0_i32_1 = arith.constant 0 : i32
    return %c0_i32, %arg0, %c0_i32_0 : i32, i32, i32
  }
  func.func @transform_1(%arg0: i32) -> (i32, i32) {
    %c0_i32 = arith.constant 0 : i32
    %c0_i32_0 = arith.constant 0 : i32
    %c0_i32_1 = arith.constant 0 : i32
    return %c0_i32, %c0_i32_0 : i32, i32
  }
  func.func @transform_2(%arg0: i32) -> (i32, i32) {
    %c0_i32 = arith.constant 0 : i32
    %c0_i32_0 = arith.constant 0 : i32
    %c0_i32_1 = arith.constant 0 : i32
    return %c0_i32, %c0_i32_0 : i32, i32
  }
  func.func @transform_3(%arg0: i32) -> (i32, i32) {
    %c0_i32 = arith.constant 0 : i32
    %c0_i32_0 = arith.constant 0 : i32
    %c0_i32_1 = arith.constant 0 : i32
    return %c0_i32, %c0_i32_0 : i32, i32
  }
  func.func @transform_4(%arg0: i32) -> (i32, i32) {
    %c0_i32 = arith.constant 0 : i32
    %c0_i32_0 = arith.constant 0 : i32
    %c0_i32_1 = arith.constant 0 : i32
    return %c0_i32, %c0_i32_0 : i32, i32
  }
  func.func @transform_5(%arg0: i32) -> (i32, i32) {
    %c0_i32 = arith.constant 0 : i32
    %c0_i32_0 = arith.constant 0 : i32
    %c0_i32_1 = arith.constant 0 : i32
    return %c0_i32, %c0_i32_0 : i32, i32
  }
  func.func @transform_6(%arg0: i32) -> (i32, i32) {
    %c0_i32 = arith.constant 0 : i32
    %c0_i32_0 = arith.constant 0 : i32
    return %arg0, %c0_i32 : i32, i32
  }
}

</mosaic_0001>

<llo_original>
// kernel: tpu_custom_call.1
$region0: #{tpu_custom_call.1}
  #allocation0 [shape = 'u32[]', space=smem, size = 0x4, offset = 0x4, fixed_abs, tag = 'smem constant byte address 0x4 - core index']
  #allocation1 [shape = 'u32[144,128]{1,0:T(1,128)}', space=vmem, size = 0x12000, scoped, tag = 'internal scratch']
  %s0 = inlined_call_operand.vmem [shape: f32[8,8,16], index: 0, kind: input, shape index: {}]
  %s1 = inlined_call_operand.hbm [shape: f32[96,256], index: 1, kind: input, shape index: {}]
  %s2 = inlined_call_operand.vmem [shape: f32[1,256], index: 2, kind: input, shape index: {}]
  %s3 = inlined_call_operand.vmem [shape: f32[1,64], index: 3, kind: input, shape index: {}]
  %s4 = inlined_call_operand.vmem [shape: f32[64,2], index: 4, kind: input, shape index: {}]
  %s5 = inlined_call_operand.vmem [shape: f32[1,2], index: 5, kind: input, shape index: {}]
  %s6 = inlined_call_operand.vmem [shape: f32[8,2], index: 6, kind: output, shape index: {}]
  %s7 = sld [smem:[#allocation0]]
  $region38: #{tpu_custom_call.1} parent=0
    _
  %s9 = ssub.s32 1, %s7
  %s10 = scalar_select 0, %s9, %s7
  $region1: #{tpu_custom_call.1} parent=0
    #allocation2 [shape = 'u8[98304]{0}', space=vmem, size = 0x18000, scoped, tag = 'input window, operand 1, single buffered']
    #allocation3 [shape = 's32[1]{0}', space=sflag, size = 0x4, scoped, tag = 'scoped memory for tpu_custom_call.1']
    %11 = vsyncpa [#allocation3], 0
    // Predicated region
    $region2: #{tpu_custom_call.1} parent=1 // pred_check
      _
    $region3: #{tpu_custom_call.1} parent=1 // pred_check_branch
      %13 = sbr.rel (0) target = $region5
    $region4: #{tpu_custom_call.1} parent=1 // pred_region
      _
    $region5: #{tpu_custom_call.1} parent=1 // pred_fallthru
      _
    // Predicated region
    $region6: #{tpu_custom_call.1} parent=1 // pred_check
      _
    $region7: #{tpu_custom_call.1} parent=1 // pred_check_branch
      %15 = sbr.rel (0) target = $region9
    $region8: #{tpu_custom_call.1} parent=1 // pred_region
      %s17 = ssub.s32 3072, 3072
      %18 = vsyncadd [#allocation3], %s17
      %s19 = sshll.u32 [#allocation2], 4
      %s20 = int_to_ptr.vmem [resolvable:$true] %s19
      %25 = dma.hbm_to_vmem [thread:$0]  %s1, 3072, %s20, [#allocation3], 256, 256, 16
    $region9: #{tpu_custom_call.1} parent=1 // pred_fallthru
      _
    // Predicated region
    $region10: #{tpu_custom_call.1} parent=1 // pred_check
      _
    $region11: #{tpu_custom_call.1} parent=1 // pred_check_branch
      %27 = sbr.rel (0) target = $region13
    $region12: #{tpu_custom_call.1} parent=1 // pred_region
      _
    $region13: #{tpu_custom_call.1} parent=1 // pred_fallthru
      _
    // Predicated region
    $region14: #{tpu_custom_call.1} parent=1 // pred_check
      _
    $region15: #{tpu_custom_call.1} parent=1 // pred_check_branch
      %29 = sbr.rel (0) target = $region17
    $region16: #{tpu_custom_call.1} parent=1 // pred_region
      _
    $region17: #{tpu_custom_call.1} parent=1 // pred_fallthru
      _
    // Predicated region
    $region18: #{tpu_custom_call.1} parent=1 // pred_check
      _
    $region19: #{tpu_custom_call.1} parent=1 // pred_check_branch
      %31 = sbr.rel (0) target = $region21
    $region20: #{tpu_custom_call.1} parent=1 // pred_region
      _
    $region21: #{tpu_custom_call.1} parent=1 // pred_fallthru
      _
    // Predicated region
    $region22: #{tpu_custom_call.1} parent=1 // pred_check
      _
    $region23: #{tpu_custom_call.1} parent=1 // pred_check_branch
      %33 = sbr.rel (0) target = $region25
    $region24: #{tpu_custom_call.1} parent=1 // pred_region
      _
    $region25: #{tpu_custom_call.1} parent=1 // pred_fallthru
      _
    // Predicated region
    $region26: #{tpu_custom_call.1} parent=1 // pred_check
      _
    $region27: #{tpu_custom_call.1} parent=1 // pred_check_branch
      %35 = sbr.rel (0) target = $region29
    $region28: #{tpu_custom_call.1} parent=1 // pred_region
      %36 = dma.done [#allocation3], 3072
    $region29: #{tpu_custom_call.1} parent=1 // pred_fallthru
      _
    %v37 = vld [vmem:[#allocation2] sm:$0xff]
    %v38 = vld [vmem:[#allocation2 + $0x8] sm:$0xff]
    %v39 = vld [vmem:[#allocation2 + $0x10] sm:$0xff]
    %v40 = vld [vmem:[#allocation2 + $0x18] sm:$0xff]
    %v41 = vld [vmem:[#allocation2 + $0x20] sm:$0xff]
    %v42 = vld [vmem:[#allocation2 + $0x28] sm:$0xff]
    %v43 = vld [vmem:[#allocation2 + $0x30] sm:$0xff]
    %v44 = vld [vmem:[#allocation2 + $0x38] sm:$0xff]
    %v45 = vld [vmem:[#allocation2 + $0x40] sm:$0xff]
    %v46 = vld [vmem:[#allocation2 + $0x48] sm:$0xff]
    %v47 = vld [vmem:[#allocation2 + $0x50] sm:$0xff]
    %v48 = vld [vmem:[#allocation2 + $0x58] sm:$0xff]
    %v49 = vld [vmem:[#allocation2 + $0x60] sm:$0xff]
    %v50 = vld [vmem:[#allocation2 + $0x68] sm:$0xff]
    %v51 = vld [vmem:[#allocation2 + $0x70] sm:$0xff]
    %v52 = vld [vmem:[#allocation2 + $0x78] sm:$0xff]
    %v53 = vld [vmem:[#allocation2 + $0x80] sm:$0xff]
    %v54 = vld [vmem:[#allocation2 + $0x88] sm:$0xff]
    %v55 = vld [vmem:[#allocation2 + $0x90] sm:$0xff]
    %v56 = vld [vmem:[#allocation2 + $0x98] sm:$0xff]
    %v57 = vld [vmem:[#allocation2 + $0xa0] sm:$0xff]
    %v58 = vld [vmem:[#allocation2 + $0xa8] sm:$0xff]
    %v59 = vld [vmem:[#allocation2 + $0xb0] sm:$0xff]
    %v60 = vld [vmem:[#allocation2 + $0xb8] sm:$0xff]
    %v61 = vld [vmem:[%s2] sm:$0x3]
    %v62 = vld [vmem:[%s0] sm:$0xff]
    %s63 = scalar_lea.vmem %s0, 56
    %v64 = vld [vmem:[%s63] sm:$0xff]
    %66 = vrot.lane.b32.xlu0 %v64, 16
    %v67 = vpop.permute.xlu0 %66
    %vm69 = vcmask 130048
    %v70 = vsel %vm69, %v62, %v67
    %vm71 = vcmask 261120
    %v72 = vsel %vm71, %v70, 0.0
    %vm73 = vcmask 523264
    %v74 = vsel %vm73, %v72, 0.0
    %v76 = vlaneseq
    %v77 = vshrl.u32 %v76, 7
    %v78 = vsub.s32 0, %v77
    %v79 = vrot.slane %v61, %v78
    %v80 = vlaneseq
    %v81 = vshrl.u32 %v80, 7
    %v82 = vsub.s32 1, %v81
    %v83 = vrot.slane %v61, %v82
    %vm86 = vcmask 785408
    %v88 = vsel %vm86, %v74, 0
    %90 = vmatprep.subr.mxu0 %v38
    %91 = vmatpush1.msra.mxu0 %v37
    %92 = vmatprep.subr.mxu0 %v40
    %93 = vmatpush1.msra.mxu0 %v39
    %94 = vmatprep.subr.mxu0 %v42
    %95 = vmatpush1.msra.mxu0 %v41
    %96 = vmatprep.subr.mxu0 %v44
    %97 = vmatpush1.msra.mxu0 %v43
    %98 = vmatprep.subr.mxu0 %v46
    %99 = vmatpush1.msra.mxu0 %v45
    %100 = vmatprep.subr.mxu0 %v48
    %101 = vmatpush1.msra.mxu0 %v47
    %102 = vmatprep.subr.mxu0 %v50
    %103 = vmatpush1.msra.mxu0 %v49
    %104 = vmatprep.subr.mxu0 %v52
    %105 = vmatpush1.msra.mxu0 %v51
    %106 = vmatprep.subr.mxu0 %v54
    %107 = vmatpush1.msra.mxu0 %v53
    %108 = vmatprep.subr.mxu0 %v56
    %109 = vmatpush1.msra.mxu0 %v55
    %110 = vmatprep.subr.mxu0 %v58
    %111 = vmatpush1.msra.mxu0 %v57
    %112 = vmatprep.subr.mxu0 %v60
    %113 = vmatpush1.msra.mxu0 %v59
    %114 = vmatprep.subr.mxu0 0.0
    %115 = vmatpush1.msra.mxu0 0.0
    %116 = vmatprep.subr.mxu0 0.0
    %117 = vmatpush1.msra.mxu0 0.0
    %118 = vmatprep.subr.mxu0 0.0
    %119 = vmatpush1.msra.mxu0 0.0
    %120 = vmatprep.subr.mxu0 0.0
    %121 = vmatpush1.msra.mxu0 0.0
    %122 = vmatprep.subr.mxu0 0.0
    %123 = vmatpush1.msra.mxu0 0.0
    %124 = vmatprep.subr.mxu0 0.0
    %125 = vmatpush1.msra.mxu0 0.0
    %126 = vmatprep.subr.mxu0 0.0
    %127 = vmatpush1.msra.mxu0 0.0
    %128 = vmatprep.subr.mxu0 0.0
    %129 = vmatpush1.msra.mxu0 0.0
    %130 = vmatprep.subr.mxu0 0.0
    %131 = vmatpush1.msra.mxu0 0.0
    %132 = vmatprep.subr.mxu0 0.0
    %133 = vmatpush1.msra.mxu0 0.0
    %134 = vmatprep.subr.mxu0 0.0
    %135 = vmatpush1.msra.mxu0 0.0
    %136 = vmatprep.subr.mxu0 0.0
    %137 = vmatpush1.msra.mxu0 0.0
    %138 = vmatprep.subr.mxu0 0.0
    %139 = vmatpush1.msra.mxu0 0.0
    %140 = vmatprep.subr.mxu0 0.0
    %141 = vmatpush1.msra.mxu0 0.0
    %142 = vmatprep.subr.mxu0 0.0
    %143 = vmatpush1.msra.mxu0 0.0
    %144 = vmatprep.subr.mxu0 0.0
    %145 = vmatpush1.msra.mxu0 0.0
    %146 = vmatprep.subr.mxu0 0.0
    %147 = vmatpush1.msra.mxu0 0.0
    %148 = vmatprep.subr.mxu0 0.0
    %149 = vmatpush1.msra.mxu0 0.0
    %150 = vmatprep.subr.mxu0 0.0
    %151 = vmatpush1.msra.mxu0 0.0
    %152 = vmatprep.subr.mxu0 0.0
    %153 = vmatpush1.msra.mxu0 0.0
    %154 = vmatprep.mubr.f32.mxu0 0.0
    %155 = vmatmul.mubr.f32.gmra.mrb[0].mxu0 %v88
    %v156 = vpop.f32.mrb[0].mxu0
    %v157 = vadd.f32 %v79, %v156
    %v158 = vpop.f32.mrb[0].mxu0
    %v159 = vadd.f32 %v83, %v158
    %160 = vdwg.mxu0
    %v161 = vsub.f32 0.0, %v157
    %v162 = vmul.f32 %v161, 1.442695
    %v163 = vpow.pop %v162
    %v164 = vadd.f32 %v163, 1.0
    %v165 = vrcp.pop %v164
    %v166 = vmul.f32 1.0, %v165
    %v167 = vtanh.pop %v157
    %v168 = vmul.f32 %v166, 0.0
    %170 = vrot.lane.b32.xlu0 %v167, 64
    %v171 = vpop.permute.xlu0 %170
    %v173 = vmul.f32 %v166, %v171
    %175 = vrot.lane.b32.xlu0 %v173, 32
    %v176 = vpop.permute.xlu0 %175
    %v178 = vadd.f32 %v168, %v176
    %v179 = vtanh.pop %v178
    %181 = vrot.lane.b32.xlu0 %v179, 64
    %v182 = vpop.permute.xlu0 %181
    %v184 = vmul.f32 %v166, %v182
    %v185 = vsub.f32 0.0, %v159
    %v186 = vmul.f32 %v185, 1.442695
    %v187 = vpow.pop %v186
    %v188 = vadd.f32 %v187, 1.0
    %v189 = vrcp.pop %v188
    %v190 = vmul.f32 1.0, %v189
    %v191 = vtanh.pop %v159
    %v192 = vmul.f32 %v190, 0.0
    %194 = vrot.lane.b32.xlu0 %v191, 64
    %v195 = vpop.permute.xlu0 %194
    %v197 = vmul.f32 %v190, %v195
    %199 = vrot.lane.b32.xlu0 %v197, 32
    %v200 = vpop.permute.xlu0 %199
    %v202 = vadd.f32 %v192, %v200
    %v203 = vtanh.pop %v202
    %205 = vrot.lane.b32.xlu0 %v203, 64
    %v206 = vpop.permute.xlu0 %205
    %v208 = vmul.f32 %v190, %v206
    %s209 = scalar_lea.vmem %s0, 8
    %v210 = vld [vmem:[%s209] sm:$0xff]
    %s211 = scalar_lea.vmem %s0, 48
    %v212 = vld [vmem:[%s211] sm:$0xff]
    %214 = vrot.lane.b32.xlu0 %v212, 16
    %v215 = vpop.permute.xlu0 %214
    %218 = vrot.lane.b32.xlu0 %v184, 64
    %v219 = vpop.permute.xlu0 %218
    %222 = vrot.lane.b32.xlu0 %v208, 96
    %v223 = vpop.permute.xlu0 %222
    %v225 = vsel %vm69, %v210, %v215
    %v226 = vsel %vm71, %v225, %v219
    %v227 = vsel %vm73, %v226, %v223
    %v229 = vsel %vm86, %v227, 0
    %231 = vmatprep.subr.mxu0 %v38
    %232 = vmatpush1.msra.mxu0 %v37
    %233 = vmatprep.subr.mxu0 %v40
    %234 = vmatpush1.msra.mxu0 %v39
    %235 = vmatprep.subr.mxu0 %v42
    %236 = vmatpush1.msra.mxu0 %v41
    %237 = vmatprep.subr.mxu0 %v44
    %238 = vmatpush1.msra.mxu0 %v43
    %239 = vmatprep.subr.mxu0 %v46
    %240 = vmatpush1.msra.mxu0 %v45
    %241 = vmatprep.subr.mxu0 %v48
    %242 = vmatpush1.msra.mxu0 %v47
    %243 = vmatprep.subr.mxu0 %v50
    %244 = vmatpush1.msra.mxu0 %v49
    %245 = vmatprep.subr.mxu0 %v52
    %246 = vmatpush1.msra.mxu0 %v51
    %247 = vmatprep.subr.mxu0 %v54
    %248 = vmatpush1.msra.mxu0 %v53
    %249 = vmatprep.subr.mxu0 %v56
    %250 = vmatpush1.msra.mxu0 %v55
    %251 = vmatprep.subr.mxu0 %v58
    %252 = vmatpush1.msra.mxu0 %v57
    %253 = vmatprep.subr.mxu0 %v60
    %254 = vmatpush1.msra.mxu0 %v59
    %255 = vmatprep.subr.mxu0 0.0
    %256 = vmatpush1.msra.mxu0 0.0
    %257 = vmatprep.subr.mxu0 0.0
    %258 = vmatpush1.msra.mxu0 0.0
    %259 = vmatprep.subr.mxu0 0.0
    %260 = vmatpush1.msra.mxu0 0.0
    %261 = vmatprep.subr.mxu0 0.0
    %262 = vmatpush1.msra.mxu0 0.0
    %263 = vmatprep.subr.mxu0 0.0
    %264 = vmatpush1.msra.mxu0 0.0
    %265 = vmatprep.subr.mxu0 0.0
    %266 = vmatpush1.msra.mxu0 0.0
    %267 = vmatprep.subr.mxu0 0.0
    %268 = vmatpush1.msra.mxu0 0.0
    %269 = vmatprep.subr.mxu0 0.0
    %270 = vmatpush1.msra.mxu0 0.0
    %271 = vmatprep.subr.mxu0 0.0
    %272 = vmatpush1.msra.mxu0 0.0
    %273 = vmatprep.subr.mxu0 0.0
    %274 = vmatpush1.msra.mxu0 0.0
    %275 = vmatprep.subr.mxu0 0.0
    %276 = vmatpush1.msra.mxu0 0.0
    %277 = vmatprep.subr.mxu0 0.0
    %278 = vmatpush1.msra.mxu0 0.0
    %279 = vmatprep.subr.mxu0 0.0
    %280 = vmatpush1.msra.mxu0 0.0
    %281 = vmatprep.subr.mxu0 0.0
    %282 = vmatpush1.msra.mxu0 0.0
    %283 = vmatprep.subr.mxu0 0.0
    %284 = vmatpush1.msra.mxu0 0.0
    %285 = vmatprep.subr.mxu0 0.0
    %286 = vmatpush1.msra.mxu0 0.0
    %287 = vmatprep.subr.mxu0 0.0
    %288 = vmatpush1.msra.mxu0 0.0
    %289 = vmatprep.subr.mxu0 0.0
    %290 = vmatpush1.msra.mxu0 0.0
    %291 = vmatprep.subr.mxu0 0.0
    %292 = vmatpush1.msra.mxu0 0.0
    %293 = vmatprep.subr.mxu0 0.0
    %294 = vmatpush1.msra.mxu0 0.0
    %295 = vmatprep.mubr.f32.mxu0 0.0
    %296 = vmatmul.mubr.f32.gmra.mrb[0].mxu0 %v229
    %v297 = vpop.f32.mrb[0].mxu0
    %v298 = vadd.f32 %v79, %v297
    %v299 = vpop.f32.mrb[0].mxu0
    %v300 = vadd.f32 %v83, %v299
    %301 = vdwg.mxu0
    %v302 = vsub.f32 0.0, %v298
    %v303 = vmul.f32 %v302, 1.442695
    %v304 = vpow.pop %v303
    %v305 = vadd.f32 %v304, 1.0
    %v306 = vrcp.pop %v305
    %v307 = vmul.f32 1.0, %v306
    %v308 = vtanh.pop %v298
    %v309 = vmul.f32 %v307, %v178
    %311 = vrot.lane.b32.xlu0 %v308, 64
    %v312 = vpop.permute.xlu0 %311
    %v314 = vmul.f32 %v307, %v312
    %316 = vrot.lane.b32.xlu0 %v314, 32
    %v317 = vpop.permute.xlu0 %316
    %v319 = vadd.f32 %v309, %v317
    %v320 = vtanh.pop %v319
    %322 = vrot.lane.b32.xlu0 %v320, 64
    %v323 = vpop.permute.xlu0 %322
    %v325 = vmul.f32 %v307, %v323
    %v326 = vsub.f32 0.0, %v300
    %v327 = vmul.f32 %v326, 1.442695
    %v328 = vpow.pop %v327
    %v329 = vadd.f32 %v328, 1.0
    %v330 = vrcp.pop %v329
    %v331 = vmul.f32 1.0, %v330
    %v332 = vtanh.pop %v300
    %v333 = vmul.f32 %v331, %v202
    %335 = vrot.lane.b32.xlu0 %v332, 64
    %v336 = vpop.permute.xlu0 %335
    %v338 = vmul.f32 %v331, %v336
    %340 = vrot.lane.b32.xlu0 %v338, 32
    %v341 = vpop.permute.xlu0 %340
    %v343 = vadd.f32 %v333, %v341
    %v344 = vtanh.pop %v343
    %346 = vrot.lane.b32.xlu0 %v344, 64
    %v347 = vpop.permute.xlu0 %346
    %v349 = vmul.f32 %v331, %v347
    %s350 = scalar_lea.vmem %s0, 16
    %v351 = vld [vmem:[%s350] sm:$0xff]
    %s352 = scalar_lea.vmem %s0, 40
    %v353 = vld [vmem:[%s352] sm:$0xff]
    %355 = vrot.lane.b32.xlu0 %v353, 16
    %v356 = vpop.permute.xlu0 %355
    %359 = vrot.lane.b32.xlu0 %v325, 64
    %v360 = vpop.permute.xlu0 %359
    %363 = vrot.lane.b32.xlu0 %v349, 96
    %v364 = vpop.permute.xlu0 %363
    %v366 = vsel %vm69, %v351, %v356
    %v367 = vsel %vm71, %v366, %v360
    %v368 = vsel %vm73, %v367, %v364
    %v370 = vsel %vm86, %v368, 0
    %372 = vmatprep.subr.mxu0 %v38
    %373 = vmatpush1.msra.mxu0 %v37
    %374 = vmatprep.subr.mxu0 %v40
    %375 = vmatpush1.msra.mxu0 %v39
    %376 = vmatprep.subr.mxu0 %v42
    %377 = vmatpush1.msra.mxu0 %v41
    %378 = vmatprep.subr.mxu0 %v44
    %379 = vmatpush1.msra.mxu0 %v43
    %380 = vmatprep.subr.mxu0 %v46
    %381 = vmatpush1.msra.mxu0 %v45
    %382 = vmatprep.subr.mxu0 %v48
    %383 = vmatpush1.msra.mxu0 %v47
    %384 = vmatprep.subr.mxu0 %v50
    %385 = vmatpush1.msra.mxu0 %v49
    %386 = vmatprep.subr.mxu0 %v52
    %387 = vmatpush1.msra.mxu0 %v51
    %388 = vmatprep.subr.mxu0 %v54
    %389 = vmatpush1.msra.mxu0 %v53
    %390 = vmatprep.subr.mxu0 %v56
    %391 = vmatpush1.msra.mxu0 %v55
    %392 = vmatprep.subr.mxu0 %v58
    %393 = vmatpush1.msra.mxu0 %v57
    %394 = vmatprep.subr.mxu0 %v60
    %395 = vmatpush1.msra.mxu0 %v59
    %396 = vmatprep.subr.mxu0 0.0
    %397 = vmatpush1.msra.mxu0 0.0
    %398 = vmatprep.subr.mxu0 0.0
    %399 = vmatpush1.msra.mxu0 0.0
    %400 = vmatprep.subr.mxu0 0.0
    %401 = vmatpush1.msra.mxu0 0.0
    %402 = vmatprep.subr.mxu0 0.0
    %403 = vmatpush1.msra.mxu0 0.0
    %404 = vmatprep.subr.mxu0 0.0
    %405 = vmatpush1.msra.mxu0 0.0
    %406 = vmatprep.subr.mxu0 0.0
    %407 = vmatpush1.msra.mxu0 0.0
    %408 = vmatprep.subr.mxu0 0.0
    %409 = vmatpush1.msra.mxu0 0.0
    %410 = vmatprep.subr.mxu0 0.0
    %411 = vmatpush1.msra.mxu0 0.0
    %412 = vmatprep.subr.mxu0 0.0
    %413 = vmatpush1.msra.mxu0 0.0
    %414 = vmatprep.subr.mxu0 0.0
    %415 = vmatpush1.msra.mxu0 0.0
    %416 = vmatprep.subr.mxu0 0.0
    %417 = vmatpush1.msra.mxu0 0.0
    %418 = vmatprep.subr.mxu0 0.0
    %419 = vmatpush1.msra.mxu0 0.0
    %420 = vmatprep.subr.mxu0 0.0
    %421 = vmatpush1.msra.mxu0 0.0
    %422 = vmatprep.subr.mxu0 0.0
    %423 = vmatpush1.msra.mxu0 0.0
    %424 = vmatprep.subr.mxu0 0.0
    %425 = vmatpush1.msra.mxu0 0.0
    %426 = vmatprep.subr.mxu0 0.0
    %427 = vmatpush1.msra.mxu0 0.0
    %428 = vmatprep.subr.mxu0 0.0
    %429 = vmatpush1.msra.mxu0 0.0
    %430 = vmatprep.subr.mxu0 0.0
    %431 = vmatpush1.msra.mxu0 0.0
    %432 = vmatprep.subr.mxu0 0.0
    %433 = vmatpush1.msra.mxu0 0.0
    %434 = vmatprep.subr.mxu0 0.0
    %435 = vmatpush1.msra.mxu0 0.0
    %436 = vmatprep.mubr.f32.mxu0 0.0
    %437 = vmatmul.mubr.f32.gmra.mrb[0].mxu0 %v370
    %v438 = vpop.f32.mrb[0].mxu0
    %v439 = vadd.f32 %v79, %v438
    %v440 = vpop.f32.mrb[0].mxu0
    %v441 = vadd.f32 %v83, %v440
    %442 = vdwg.mxu0
    %v443 = vsub.f32 0.0, %v439
    %v444 = vmul.f32 %v443, 1.442695
    %v445 = vpow.pop %v444
    %v446 = vadd.f32 %v445, 1.0
    %v447 = vrcp.pop %v446
    %v448 = vmul.f32 1.0, %v447
    %v449 = vtanh.pop %v439
    %v450 = vmul.f32 %v448, %v319
    %452 = vrot.lane.b32.xlu0 %v449, 64
    %v453 = vpop.permute.xlu0 %452
    %v455 = vmul.f32 %v448, %v453
    %457 = vrot.lane.b32.xlu0 %v455, 32
    %v458 = vpop.permute.xlu0 %457
    %v460 = vadd.f32 %v450, %v458
    %v461 = vtanh.pop %v460
    %463 = vrot.lane.b32.xlu0 %v461, 64
    %v464 = vpop.permute.xlu0 %463
    %v466 = vmul.f32 %v448, %v464
    %v467 = vsub.f32 0.0, %v441
    %v468 = vmul.f32 %v467, 1.442695
    %v469 = vpow.pop %v468
    %v470 = vadd.f32 %v469, 1.0
    %v471 = vrcp.pop %v470
    %v472 = vmul.f32 1.0, %v471
    %v473 = vtanh.pop %v441
    %v474 = vmul.f32 %v472, %v343
    %476 = vrot.lane.b32.xlu0 %v473, 64
    %v477 = vpop.permute.xlu0 %476
    %v479 = vmul.f32 %v472, %v477
    %481 = vrot.lane.b32.xlu0 %v479, 32
    %v482 = vpop.permute.xlu0 %481
    %v484 = vadd.f32 %v474, %v482
    %v485 = vtanh.pop %v484
    %487 = vrot.lane.b32.xlu0 %v485, 64
    %v488 = vpop.permute.xlu0 %487
    %v490 = vmul.f32 %v472, %v488
    %s491 = scalar_lea.vmem %s0, 24
    %v492 = vld [vmem:[%s491] sm:$0xff]
    %s493 = scalar_lea.vmem %s0, 32
    %v494 = vld [vmem:[%s493] sm:$0xff]
    %496 = vrot.lane.b32.xlu0 %v494, 16
    %v497 = vpop.permute.xlu0 %496
    %500 = vrot.lane.b32.xlu0 %v466, 64
    %v501 = vpop.permute.xlu0 %500
    %504 = vrot.lane.b32.xlu0 %v490, 96
    %v505 = vpop.permute.xlu0 %504
    %v507 = vsel %vm69, %v492, %v497
    %v508 = vsel %vm71, %v507, %v501
    %v509 = vsel %vm73, %v508, %v505
    %v511 = vsel %vm86, %v509, 0
    %513 = vmatprep.subr.mxu0 %v38
    %514 = vmatpush1.msra.mxu0 %v37
    %515 = vmatprep.subr.mxu0 %v40
    %516 = vmatpush1.msra.mxu0 %v39
    %517 = vmatprep.subr.mxu0 %v42
    %518 = vmatpush1.msra.mxu0 %v41
    %519 = vmatprep.subr.mxu0 %v44
    %520 = vmatpush1.msra.mxu0 %v43
    %521 = vmatprep.subr.mxu0 %v46
    %522 = vmatpush1.msra.mxu0 %v45
    %523 = vmatprep.subr.mxu0 %v48
    %524 = vmatpush1.msra.mxu0 %v47
    %525 = vmatprep.subr.mxu0 %v50
    %526 = vmatpush1.msra.mxu0 %v49
    %527 = vmatprep.subr.mxu0 %v52
    %528 = vmatpush1.msra.mxu0 %v51
    %529 = vmatprep.subr.mxu0 %v54
    %530 = vmatpush1.msra.mxu0 %v53
    %531 = vmatprep.subr.mxu0 %v56
    %532 = vmatpush1.msra.mxu0 %v55
    %533 = vmatprep.subr.mxu0 %v58
    %534 = vmatpush1.msra.mxu0 %v57
    %535 = vmatprep.subr.mxu0 %v60
    %536 = vmatpush1.msra.mxu0 %v59
    %537 = vmatprep.subr.mxu0 0.0
    %538 = vmatpush1.msra.mxu0 0.0
    %539 = vmatprep.subr.mxu0 0.0
    %540 = vmatpush1.msra.mxu0 0.0
    %541 = vmatprep.subr.mxu0 0.0
    %542 = vmatpush1.msra.mxu0 0.0
    %543 = vmatprep.subr.mxu0 0.0
    %544 = vmatpush1.msra.mxu0 0.0
    %545 = vmatprep.subr.mxu0 0.0
    %546 = vmatpush1.msra.mxu0 0.0
    %547 = vmatprep.subr.mxu0 0.0
    %548 = vmatpush1.msra.mxu0 0.0
    %549 = vmatprep.subr.mxu0 0.0
    %550 = vmatpush1.msra.mxu0 0.0
    %551 = vmatprep.subr.mxu0 0.0
    %552 = vmatpush1.msra.mxu0 0.0
    %553 = vmatprep.subr.mxu0 0.0
    %554 = vmatpush1.msra.mxu0 0.0
    %555 = vmatprep.subr.mxu0 0.0
    %556 = vmatpush1.msra.mxu0 0.0
    %557 = vmatprep.subr.mxu0 0.0
    %558 = vmatpush1.msra.mxu0 0.0
    %559 = vmatprep.subr.mxu0 0.0
    %560 = vmatpush1.msra.mxu0 0.0
    %561 = vmatprep.subr.mxu0 0.0
    %562 = vmatpush1.msra.mxu0 0.0
    %563 = vmatprep.subr.mxu0 0.0
    %564 = vmatpush1.msra.mxu0 0.0
    %565 = vmatprep.subr.mxu0 0.0
    %566 = vmatpush1.msra.mxu0 0.0
    %567 = vmatprep.subr.mxu0 0.0
    %568 = vmatpush1.msra.mxu0 0.0
    %569 = vmatprep.subr.mxu0 0.0
    %570 = vmatpush1.msra.mxu0 0.0
    %571 = vmatprep.subr.mxu0 0.0
    %572 = vmatpush1.msra.mxu0 0.0
    %573 = vmatprep.subr.mxu0 0.0
    %574 = vmatpush1.msra.mxu0 0.0
    %575 = vmatprep.subr.mxu0 0.0
    %576 = vmatpush1.msra.mxu0 0.0
    %577 = vmatprep.mubr.f32.mxu0 0.0
    %578 = vmatmul.mubr.f32.gmra.mrb[0].mxu0 %v511
    %v579 = vpop.f32.mrb[0].mxu0
    %v580 = vadd.f32 %v79, %v579
    %v581 = vpop.f32.mrb[0].mxu0
    %v582 = vadd.f32 %v83, %v581
    %583 = vdwg.mxu0
    %v584 = vsub.f32 0.0, %v580
    %v585 = vmul.f32 %v584, 1.442695
    %v586 = vpow.pop %v585
    %v587 = vadd.f32 %v586, 1.0
    %v588 = vrcp.pop %v587
    %v589 = vmul.f32 1.0, %v588
    %v590 = vtanh.pop %v580
    %v591 = vmul.f32 %v589, %v460
    %593 = vrot.lane.b32.xlu0 %v590, 64
    %v594 = vpop.permute.xlu0 %593
    %v596 = vmul.f32 %v589, %v594
    %598 = vrot.lane.b32.xlu0 %v596, 32
    %v599 = vpop.permute.xlu0 %598
    %v601 = vadd.f32 %v591, %v599
    %v602 = vtanh.pop %v601
    %604 = vrot.lane.b32.xlu0 %v602, 64
    %v605 = vpop.permute.xlu0 %604
    %v607 = vmul.f32 %v589, %v605
    %v608 = vsub.f32 0.0, %v582
    %v609 = vmul.f32 %v608, 1.442695
    %v610 = vpow.pop %v609
    %v611 = vadd.f32 %v610, 1.0
    %v612 = vrcp.pop %v611
    %v613 = vmul.f32 1.0, %v612
    %v614 = vtanh.pop %v582
    %v615 = vmul.f32 %v613, %v484
    %617 = vrot.lane.b32.xlu0 %v614, 64
    %v618 = vpop.permute.xlu0 %617
    %v620 = vmul.f32 %v613, %v618
    %622 = vrot.lane.b32.xlu0 %v620, 32
    %v623 = vpop.permute.xlu0 %622
    %v625 = vadd.f32 %v615, %v623
    %v626 = vtanh.pop %v625
    %628 = vrot.lane.b32.xlu0 %v626, 64
    %v629 = vpop.permute.xlu0 %628
    %v631 = vmul.f32 %v613, %v629
    %633 = vrot.lane.b32.xlu0 %v492, 16
    %v634 = vpop.permute.xlu0 %633
    %637 = vrot.lane.b32.xlu0 %v607, 64
    %v638 = vpop.permute.xlu0 %637
    %641 = vrot.lane.b32.xlu0 %v631, 96
    %v642 = vpop.permute.xlu0 %641
    %v644 = vsel %vm69, %v494, %v634
    %v645 = vsel %vm71, %v644, %v638
    %v646 = vsel %vm73, %v645, %v642
    %v648 = vsel %vm86, %v646, 0
    %650 = vmatprep.subr.mxu0 %v38
    %651 = vmatpush1.msra.mxu0 %v37
    %652 = vmatprep.subr.mxu0 %v40
    %653 = vmatpush1.msra.mxu0 %v39
    %654 = vmatprep.subr.mxu0 %v42
    %655 = vmatpush1.msra.mxu0 %v41
    %656 = vmatprep.subr.mxu0 %v44
    %657 = vmatpush1.msra.mxu0 %v43
    %658 = vmatprep.subr.mxu0 %v46
    %659 = vmatpush1.msra.mxu0 %v45
    %660 = vmatprep.subr.mxu0 %v48
    %661 = vmatpush1.msra.mxu0 %v47
    %662 = vmatprep.subr.mxu0 %v50
    %663 = vmatpush1.msra.mxu0 %v49
    %664 = vmatprep.subr.mxu0 %v52
    %665 = vmatpush1.msra.mxu0 %v51
    %666 = vmatprep.subr.mxu0 %v54
    %667 = vmatpush1.msra.mxu0 %v53
    %668 = vmatprep.subr.mxu0 %v56
    %669 = vmatpush1.msra.mxu0 %v55
    %670 = vmatprep.subr.mxu0 %v58
    %671 = vmatpush1.msra.mxu0 %v57
    %672 = vmatprep.subr.mxu0 %v60
    %673 = vmatpush1.msra.mxu0 %v59
    %674 = vmatprep.subr.mxu0 0.0
    %675 = vmatpush1.msra.mxu0 0.0
    %676 = vmatprep.subr.mxu0 0.0
    %677 = vmatpush1.msra.mxu0 0.0
    %678 = vmatprep.subr.mxu0 0.0
    %679 = vmatpush1.msra.mxu0 0.0
    %680 = vmatprep.subr.mxu0 0.0
    %681 = vmatpush1.msra.mxu0 0.0
    %682 = vmatprep.subr.mxu0 0.0
    %683 = vmatpush1.msra.mxu0 0.0
    %684 = vmatprep.subr.mxu0 0.0
    %685 = vmatpush1.msra.mxu0 0.0
    %686 = vmatprep.subr.mxu0 0.0
    %687 = vmatpush1.msra.mxu0 0.0
    %688 = vmatprep.subr.mxu0 0.0
    %689 = vmatpush1.msra.mxu0 0.0
    %690 = vmatprep.subr.mxu0 0.0
    %691 = vmatpush1.msra.mxu0 0.0
    %692 = vmatprep.subr.mxu0 0.0
    %693 = vmatpush1.msra.mxu0 0.0
    %694 = vmatprep.subr.mxu0 0.0
    %695 = vmatpush1.msra.mxu0 0.0
    %696 = vmatprep.subr.mxu0 0.0
    %697 = vmatpush1.msra.mxu0 0.0
    %698 = vmatprep.subr.mxu0 0.0
    %699 = vmatpush1.msra.mxu0 0.0
    %700 = vmatprep.subr.mxu0 0.0
    %701 = vmatpush1.msra.mxu0 0.0
    %702 = vmatprep.subr.mxu0 0.0
    %703 = vmatpush1.msra.mxu0 0.0
    %704 = vmatprep.subr.mxu0 0.0
    %705 = vmatpush1.msra.mxu0 0.0
    %706 = vmatprep.subr.mxu0 0.0
    %707 = vmatpush1.msra.mxu0 0.0
    %708 = vmatprep.subr.mxu0 0.0
    %709 = vmatpush1.msra.mxu0 0.0
    %710 = vmatprep.subr.mxu0 0.0
    %711 = vmatpush1.msra.mxu0 0.0
    %712 = vmatprep.subr.mxu0 0.0
    %713 = vmatpush1.msra.mxu0 0.0
    %714 = vmatprep.mubr.f32.mxu0 0.0
    %715 = vmatmul.mubr.f32.gmra.mrb[0].mxu0 %v648
    %v716 = vpop.f32.mrb[0].mxu0
    %v717 = vadd.f32 %v79, %v716
    %v718 = vpop.f32.mrb[0].mxu0
    %v719 = vadd.f32 %v83, %v718
    %720 = vdwg.mxu0
    %v721 = vsub.f32 0.0, %v717
    %v722 = vmul.f32 %v721, 1.442695
    %v723 = vpow.pop %v722
    %v724 = vadd.f32 %v723, 1.0
    %v725 = vrcp.pop %v724
    %v726 = vmul.f32 1.0, %v725
    %v727 = vtanh.pop %v717
    %v728 = vmul.f32 %v726, %v601
    %730 = vrot.lane.b32.xlu0 %v727, 64
    %v731 = vpop.permute.xlu0 %730
    %v733 = vmul.f32 %v726, %v731
    %735 = vrot.lane.b32.xlu0 %v733, 32
    %v736 = vpop.permute.xlu0 %735
    %v738 = vadd.f32 %v728, %v736
    %v739 = vtanh.pop %v738
    %741 = vrot.lane.b32.xlu0 %v739, 64
    %v742 = vpop.permute.xlu0 %741
    %v744 = vmul.f32 %v726, %v742
    %v745 = vsub.f32 0.0, %v719
    %v746 = vmul.f32 %v745, 1.442695
    %v747 = vpow.pop %v746
    %v748 = vadd.f32 %v747, 1.0
    %v749 = vrcp.pop %v748
    %v750 = vmul.f32 1.0, %v749
    %v751 = vtanh.pop %v719
    %v752 = vmul.f32 %v750, %v625
    %754 = vrot.lane.b32.xlu0 %v751, 64
    %v755 = vpop.permute.xlu0 %754
    %v757 = vmul.f32 %v750, %v755
    %759 = vrot.lane.b32.xlu0 %v757, 32
    %v760 = vpop.permute.xlu0 %759
    %v762 = vadd.f32 %v752, %v760
    %v763 = vtanh.pop %v762
    %765 = vrot.lane.b32.xlu0 %v763, 64
    %v766 = vpop.permute.xlu0 %765
    %v768 = vmul.f32 %v750, %v766
    %770 = vrot.lane.b32.xlu0 %v351, 16
    %v771 = vpop.permute.xlu0 %770
    %774 = vrot.lane.b32.xlu0 %v744, 64
    %v775 = vpop.permute.xlu0 %774
    %778 = vrot.lane.b32.xlu0 %v768, 96
    %v779 = vpop.permute.xlu0 %778
    %v781 = vsel %vm69, %v353, %v771
    %v782 = vsel %vm71, %v781, %v775
    %v783 = vsel %vm73, %v782, %v779
    %v785 = vsel %vm86, %v783, 0
    %787 = vmatprep.subr.mxu0 %v38
    %788 = vmatpush1.msra.mxu0 %v37
    %789 = vmatprep.subr.mxu0 %v40
    %790 = vmatpush1.msra.mxu0 %v39
    %791 = vmatprep.subr.mxu0 %v42
    %792 = vmatpush1.msra.mxu0 %v41
    %793 = vmatprep.subr.mxu0 %v44
    %794 = vmatpush1.msra.mxu0 %v43
    %795 = vmatprep.subr.mxu0 %v46
    %796 = vmatpush1.msra.mxu0 %v45
    %797 = vmatprep.subr.mxu0 %v48
    %798 = vmatpush1.msra.mxu0 %v47
    %799 = vmatprep.subr.mxu0 %v50
    %800 = vmatpush1.msra.mxu0 %v49
    %801 = vmatprep.subr.mxu0 %v52
    %802 = vmatpush1.msra.mxu0 %v51
    %803 = vmatprep.subr.mxu0 %v54
    %804 = vmatpush1.msra.mxu0 %v53
    %805 = vmatprep.subr.mxu0 %v56
    %806 = vmatpush1.msra.mxu0 %v55
    %807 = vmatprep.subr.mxu0 %v58
    %808 = vmatpush1.msra.mxu0 %v57
    %809 = vmatprep.subr.mxu0 %v60
    %810 = vmatpush1.msra.mxu0 %v59
    %811 = vmatprep.subr.mxu0 0.0
    %812 = vmatpush1.msra.mxu0 0.0
    %813 = vmatprep.subr.mxu0 0.0
    %814 = vmatpush1.msra.mxu0 0.0
    %815 = vmatprep.subr.mxu0 0.0
    %816 = vmatpush1.msra.mxu0 0.0
    %817 = vmatprep.subr.mxu0 0.0
    %818 = vmatpush1.msra.mxu0 0.0
    %819 = vmatprep.subr.mxu0 0.0
    %820 = vmatpush1.msra.mxu0 0.0
    %821 = vmatprep.subr.mxu0 0.0
    %822 = vmatpush1.msra.mxu0 0.0
    %823 = vmatprep.subr.mxu0 0.0
    %824 = vmatpush1.msra.mxu0 0.0
    %825 = vmatprep.subr.mxu0 0.0
    %826 = vmatpush1.msra.mxu0 0.0
    %827 = vmatprep.subr.mxu0 0.0
    %828 = vmatpush1.msra.mxu0 0.0
    %829 = vmatprep.subr.mxu0 0.0
    %830 = vmatpush1.msra.mxu0 0.0
    %831 = vmatprep.subr.mxu0 0.0
    %832 = vmatpush1.msra.mxu0 0.0
    %833 = vmatprep.subr.mxu0 0.0
    %834 = vmatpush1.msra.mxu0 0.0
    %835 = vmatprep.subr.mxu0 0.0
    %836 = vmatpush1.msra.mxu0 0.0
    %837 = vmatprep.subr.mxu0 0.0
    %838 = vmatpush1.msra.mxu0 0.0
    %839 = vmatprep.subr.mxu0 0.0
    %840 = vmatpush1.msra.mxu0 0.0
    %841 = vmatprep.subr.mxu0 0.0
    %842 = vmatpush1.msra.mxu0 0.0
    %843 = vmatprep.subr.mxu0 0.0
    %844 = vmatpush1.msra.mxu0 0.0
    %845 = vmatprep.subr.mxu0 0.0
    %846 = vmatpush1.msra.mxu0 0.0
    %847 = vmatprep.subr.mxu0 0.0
    %848 = vmatpush1.msra.mxu0 0.0
    %849 = vmatprep.subr.mxu0 0.0
    %850 = vmatpush1.msra.mxu0 0.0
    %851 = vmatprep.mubr.f32.mxu0 0.0
    %852 = vmatmul.mubr.f32.gmra.mrb[0].mxu0 %v785
    %v853 = vpop.f32.mrb[0].mxu0
    %v854 = vadd.f32 %v79, %v853
    %v855 = vpop.f32.mrb[0].mxu0
    %v856 = vadd.f32 %v83, %v855
    %857 = vdwg.mxu0
    %v858 = vsub.f32 0.0, %v854
    %v859 = vmul.f32 %v858, 1.442695
    %v860 = vpow.pop %v859
    %v861 = vadd.f32 %v860, 1.0
    %v862 = vrcp.pop %v861
    %v863 = vmul.f32 1.0, %v862
    %v864 = vtanh.pop %v854
    %v865 = vmul.f32 %v863, %v738
    %867 = vrot.lane.b32.xlu0 %v864, 64
    %v868 = vpop.permute.xlu0 %867
    %v870 = vmul.f32 %v863, %v868
    %872 = vrot.lane.b32.xlu0 %v870, 32
    %v873 = vpop.permute.xlu0 %872
    %v875 = vadd.f32 %v865, %v873
    %v876 = vtanh.pop %v875
    %878 = vrot.lane.b32.xlu0 %v876, 64
    %v879 = vpop.permute.xlu0 %878
    %v881 = vmul.f32 %v863, %v879
    %v882 = vsub.f32 0.0, %v856
    %v883 = vmul.f32 %v882, 1.442695
    %v884 = vpow.pop %v883
    %v885 = vadd.f32 %v884, 1.0
    %v886 = vrcp.pop %v885
    %v887 = vmul.f32 1.0, %v886
    %v888 = vtanh.pop %v856
    %v889 = vmul.f32 %v887, %v762
    %891 = vrot.lane.b32.xlu0 %v888, 64
    %v892 = vpop.permute.xlu0 %891
    %v894 = vmul.f32 %v887, %v892
    %896 = vrot.lane.b32.xlu0 %v894, 32
    %v897 = vpop.permute.xlu0 %896
    %v899 = vadd.f32 %v889, %v897
    %v900 = vtanh.pop %v899
    %902 = vrot.lane.b32.xlu0 %v900, 64
    %v903 = vpop.permute.xlu0 %902
    %v905 = vmul.f32 %v887, %v903
    %907 = vrot.lane.b32.xlu0 %v210, 16
    %v908 = vpop.permute.xlu0 %907
    %911 = vrot.lane.b32.xlu0 %v881, 64
    %v912 = vpop.permute.xlu0 %911
    %915 = vrot.lane.b32.xlu0 %v905, 96
    %v916 = vpop.permute.xlu0 %915
    %v918 = vsel %vm69, %v212, %v908
    %v919 = vsel %vm71, %v918, %v912
    %v920 = vsel %vm73, %v919, %v916
    %v922 = vsel %vm86, %v920, 0
    %924 = vmatprep.subr.mxu0 %v38
    %925 = vmatpush1.msra.mxu0 %v37
    %926 = vmatprep.subr.mxu0 %v40
    %927 = vmatpush1.msra.mxu0 %v39
    %928 = vmatprep.subr.mxu0 %v42
    %929 = vmatpush1.msra.mxu0 %v41
    %930 = vmatprep.subr.mxu0 %v44
    %931 = vmatpush1.msra.mxu0 %v43
    %932 = vmatprep.subr.mxu0 %v46
    %933 = vmatpush1.msra.mxu0 %v45
    %934 = vmatprep.subr.mxu0 %v48
    %935 = vmatpush1.msra.mxu0 %v47
    %936 = vmatprep.subr.mxu0 %v50
    %937 = vmatpush1.msra.mxu0 %v49
    %938 = vmatprep.subr.mxu0 %v52
    %939 = vmatpush1.msra.mxu0 %v51
    %940 = vmatprep.subr.mxu0 %v54
    %941 = vmatpush1.msra.mxu0 %v53
    %942 = vmatprep.subr.mxu0 %v56
    %943 = vmatpush1.msra.mxu0 %v55
    %944 = vmatprep.subr.mxu0 %v58
    %945 = vmatpush1.msra.mxu0 %v57
    %946 = vmatprep.subr.mxu0 %v60
    %947 = vmatpush1.msra.mxu0 %v59
    %948 = vmatprep.subr.mxu0 0.0
    %949 = vmatpush1.msra.mxu0 0.0
    %950 = vmatprep.subr.mxu0 0.0
    %951 = vmatpush1.msra.mxu0 0.0
    %952 = vmatprep.subr.mxu0 0.0
    %953 = vmatpush1.msra.mxu0 0.0
    %954 = vmatprep.subr.mxu0 0.0
    %955 = vmatpush1.msra.mxu0 0.0
    %956 = vmatprep.subr.mxu0 0.0
    %957 = vmatpush1.msra.mxu0 0.0
    %958 = vmatprep.subr.mxu0 0.0
    %959 = vmatpush1.msra.mxu0 0.0
    %960 = vmatprep.subr.mxu0 0.0
    %961 = vmatpush1.msra.mxu0 0.0
    %962 = vmatprep.subr.mxu0 0.0
    %963 = vmatpush1.msra.mxu0 0.0
    %964 = vmatprep.subr.mxu0 0.0
    %965 = vmatpush1.msra.mxu0 0.0
    %966 = vmatprep.subr.mxu0 0.0
    %967 = vmatpush1.msra.mxu0 0.0
    %968 = vmatprep.subr.mxu0 0.0
    %969 = vmatpush1.msra.mxu0 0.0
    %970 = vmatprep.subr.mxu0 0.0
    %971 = vmatpush1.msra.mxu0 0.0
    %972 = vmatprep.subr.mxu0 0.0
    %973 = vmatpush1.msra.mxu0 0.0
    %974 = vmatprep.subr.mxu0 0.0
    %975 = vmatpush1.msra.mxu0 0.0
    %976 = vmatprep.subr.mxu0 0.0
    %977 = vmatpush1.msra.mxu0 0.0
    %978 = vmatprep.subr.mxu0 0.0
    %979 = vmatpush1.msra.mxu0 0.0
    %980 = vmatprep.subr.mxu0 0.0
    %981 = vmatpush1.msra.mxu0 0.0
    %982 = vmatprep.subr.mxu0 0.0
    %983 = vmatpush1.msra.mxu0 0.0
    %984 = vmatprep.subr.mxu0 0.0
    %985 = vmatpush1.msra.mxu0 0.0
    %986 = vmatprep.subr.mxu0 0.0
    %987 = vmatpush1.msra.mxu0 0.0
    %988 = vmatprep.mubr.f32.mxu0 0.0
    %989 = vmatmul.mubr.f32.gmra.mrb[0].mxu0 %v922
    %v990 = vpop.f32.mrb[0].mxu0
    %v991 = vadd.f32 %v79, %v990
    %v992 = vpop.f32.mrb[0].mxu0
    %v993 = vadd.f32 %v83, %v992
    %994 = vdwg.mxu0
    %v995 = vsub.f32 0.0, %v991
    %v996 = vmul.f32 %v995, 1.442695
    %v997 = vpow.pop %v996
    %v998 = vadd.f32 %v997, 1.0
    %v999 = vrcp.pop %v998
    %v1000 = vmul.f32 1.0, %v999
    %v1001 = vtanh.pop %v991
    %v1002 = vmul.f32 %v1000, %v875
    %1004 = vrot.lane.b32.xlu0 %v1001, 64
    %v1005 = vpop.permute.xlu0 %1004
    %v1007 = vmul.f32 %v1000, %v1005
    %1009 = vrot.lane.b32.xlu0 %v1007, 32
    %v1010 = vpop.permute.xlu0 %1009
    %v1012 = vadd.f32 %v1002, %v1010
    %v1013 = vtanh.pop %v1012
    %1015 = vrot.lane.b32.xlu0 %v1013, 64
    %v1016 = vpop.permute.xlu0 %1015
    %v1018 = vmul.f32 %v1000, %v1016
    %v1019 = vsub.f32 0.0, %v993
    %v1020 = vmul.f32 %v1019, 1.442695
    %v1021 = vpow.pop %v1020
    %v1022 = vadd.f32 %v1021, 1.0
    %v1023 = vrcp.pop %v1022
    %v1024 = vmul.f32 1.0, %v1023
    %v1025 = vtanh.pop %v993
    %v1026 = vmul.f32 %v1024, %v899
    %1028 = vrot.lane.b32.xlu0 %v1025, 64
    %v1029 = vpop.permute.xlu0 %1028
    %v1031 = vmul.f32 %v1024, %v1029
    %1033 = vrot.lane.b32.xlu0 %v1031, 32
    %v1034 = vpop.permute.xlu0 %1033
    %v1036 = vadd.f32 %v1026, %v1034
    %v1037 = vtanh.pop %v1036
    %1039 = vrot.lane.b32.xlu0 %v1037, 64
    %v1040 = vpop.permute.xlu0 %1039
    %v1042 = vmul.f32 %v1024, %v1040
    %1044 = vrot.lane.b32.xlu0 %v62, 16
    %v1045 = vpop.permute.xlu0 %1044
    %1048 = vrot.lane.b32.xlu0 %v1018, 64
    %v1049 = vpop.permute.xlu0 %1048
    %1052 = vrot.lane.b32.xlu0 %v1042, 96
    %v1053 = vpop.permute.xlu0 %1052
    %v1055 = vsel %vm69, %v64, %v1045
    %v1056 = vsel %vm71, %v1055, %v1049
    %v1057 = vsel %vm73, %v1056, %v1053
    %v1059 = vsel %vm86, %v1057, 0
    %1061 = vmatprep.subr.mxu0 %v38
    %1062 = vmatpush1.msra.mxu0 %v37
    %1063 = vmatprep.subr.mxu0 %v40
    %1064 = vmatpush1.msra.mxu0 %v39
    %1065 = vmatprep.subr.mxu0 %v42
    %1066 = vmatpush1.msra.mxu0 %v41
    %1067 = vmatprep.subr.mxu0 %v44
    %1068 = vmatpush1.msra.mxu0 %v43
    %1069 = vmatprep.subr.mxu0 %v46
    %1070 = vmatpush1.msra.mxu0 %v45
    %1071 = vmatprep.subr.mxu0 %v48
    %1072 = vmatpush1.msra.mxu0 %v47
    %1073 = vmatprep.subr.mxu0 %v50
    %1074 = vmatpush1.msra.mxu0 %v49
    %1075 = vmatprep.subr.mxu0 %v52
    %1076 = vmatpush1.msra.mxu0 %v51
    %1077 = vmatprep.subr.mxu0 %v54
    %1078 = vmatpush1.msra.mxu0 %v53
    %1079 = vmatprep.subr.mxu0 %v56
    %1080 = vmatpush1.msra.mxu0 %v55
    %1081 = vmatprep.subr.mxu0 %v58
    %1082 = vmatpush1.msra.mxu0 %v57
    %1083 = vmatprep.subr.mxu0 %v60
    %1084 = vmatpush1.msra.mxu0 %v59
    %1085 = vmatprep.subr.mxu0 0.0
    %1086 = vmatpush1.msra.mxu0 0.0
    %1087 = vmatprep.subr.mxu0 0.0
    %1088 = vmatpush1.msra.mxu0 0.0
    %1089 = vmatprep.subr.mxu0 0.0
    %1090 = vmatpush1.msra.mxu0 0.0
    %1091 = vmatprep.subr.mxu0 0.0
    %1092 = vmatpush1.msra.mxu0 0.0
    %1093 = vmatprep.subr.mxu0 0.0
    %1094 = vmatpush1.msra.mxu0 0.0
    %1095 = vmatprep.subr.mxu0 0.0
    %1096 = vmatpush1.msra.mxu0 0.0
    %1097 = vmatprep.subr.mxu0 0.0
    %1098 = vmatpush1.msra.mxu0 0.0
    %1099 = vmatprep.subr.mxu0 0.0
    %1100 = vmatpush1.msra.mxu0 0.0
    %1101 = vmatprep.subr.mxu0 0.0
    %1102 = vmatpush1.msra.mxu0 0.0
    %1103 = vmatprep.subr.mxu0 0.0
    %1104 = vmatpush1.msra.mxu0 0.0
    %1105 = vmatprep.subr.mxu0 0.0
    %1106 = vmatpush1.msra.mxu0 0.0
    %1107 = vmatprep.subr.mxu0 0.0
    %1108 = vmatpush1.msra.mxu0 0.0
    %1109 = vmatprep.subr.mxu0 0.0
    %1110 = vmatpush1.msra.mxu0 0.0
    %1111 = vmatprep.subr.mxu0 0.0
    %1112 = vmatpush1.msra.mxu0 0.0
    %1113 = vmatprep.subr.mxu0 0.0
    %1114 = vmatpush1.msra.mxu0 0.0
    %1115 = vmatprep.subr.mxu0 0.0
    %1116 = vmatpush1.msra.mxu0 0.0
    %1117 = vmatprep.subr.mxu0 0.0
    %1118 = vmatpush1.msra.mxu0 0.0
    %1119 = vmatprep.subr.mxu0 0.0
    %1120 = vmatpush1.msra.mxu0 0.0
    %1121 = vmatprep.subr.mxu0 0.0
    %1122 = vmatpush1.msra.mxu0 0.0
    %1123 = vmatprep.subr.mxu0 0.0
    %1124 = vmatpush1.msra.mxu0 0.0
    %1125 = vmatprep.mubr.f32.mxu0 0.0
    %1126 = vmatmul.mubr.f32.gmra.mrb[0].mxu0 %v1059
    %v1127 = vpop.f32.mrb[0].mxu0
    %v1128 = vadd.f32 %v79, %v1127
    %v1129 = vpop.f32.mrb[0].mxu0
    %v1130 = vadd.f32 %v83, %v1129
    %1131 = vdwg.mxu0
    %v1132 = vsub.f32 0.0, %v1128
    %v1133 = vmul.f32 %v1132, 1.442695
    %v1134 = vpow.pop %v1133
    %v1135 = vadd.f32 %v1134, 1.0
    %v1136 = vrcp.pop %v1135
    %v1137 = vmul.f32 1.0, %v1136
    %v1138 = vtanh.pop %v1128
    %v1139 = vmul.f32 %v1137, %v1012
    %1141 = vrot.lane.b32.xlu0 %v1138, 64
    %v1142 = vpop.permute.xlu0 %1141
    %v1144 = vmul.f32 %v1137, %v1142
    %1146 = vrot.lane.b32.xlu0 %v1144, 32
    %v1147 = vpop.permute.xlu0 %1146
    %v1149 = vadd.f32 %v1139, %v1147
    %v1150 = vtanh.pop %v1149
    %1152 = vrot.lane.b32.xlu0 %v1150, 64
    %v1153 = vpop.permute.xlu0 %1152
    %v1155 = vmul.f32 %v1137, %v1153
    %v1156 = vsub.f32 0.0, %v1130
    %v1157 = vmul.f32 %v1156, 1.442695
    %v1158 = vpow.pop %v1157
    %v1159 = vadd.f32 %v1158, 1.0
    %v1160 = vrcp.pop %v1159
    %v1161 = vmul.f32 1.0, %v1160
    %v1162 = vtanh.pop %v1130
    %v1163 = vmul.f32 %v1161, %v1036
    %1165 = vrot.lane.b32.xlu0 %v1162, 64
    %v1166 = vpop.permute.xlu0 %1165
    %v1168 = vmul.f32 %v1161, %v1166
    %1170 = vrot.lane.b32.xlu0 %v1168, 32
    %v1171 = vpop.permute.xlu0 %1170
    %v1173 = vadd.f32 %v1163, %v1171
    %v1174 = vtanh.pop %v1173
    %1176 = vrot.lane.b32.xlu0 %v1174, 64
    %v1177 = vpop.permute.xlu0 %1176
    %v1179 = vmul.f32 %v1161, %v1177
    %v1180 = vld [vmem:[%s3] sm:$0x1]
    %1181 = vrot.lane.b32.xlu0 %v184, 32
    %v1182 = vpop.permute.xlu0 %1181
    %1185 = vrot.lane.b32.xlu0 %v1179, 64
    %v1186 = vpop.permute.xlu0 %1185
    %v1188 = vsel %vm71, %v1182, %v1186
    %v1190 = vlaneseq
    %v1191 = vshrl.u32 %v1190, 7
    %v1192 = vsub.s32 0, %v1191
    %v1193 = vrot.slane %v1180, %v1192
    %v1195 = vmul.f32 %v1188, %v1193
    %v1196 = vsel %vm73, %v1195, 0.0
    %1197 = vadd.xlane.f32.xlu0 %v1196
    %v1198 = vpop.xlane.xlu0 %1197
    %1199 = vrot.lane.b32.xlu0 %v325, 32
    %v1200 = vpop.permute.xlu0 %1199
    %1202 = vrot.lane.b32.xlu0 %v1042, 64
    %v1203 = vpop.permute.xlu0 %1202
    %v1205 = vsel %vm71, %v1200, %v1203
    %v1206 = vmul.f32 %v1205, %v1193
    %v1207 = vsel %vm73, %v1206, 0.0
    %1208 = vadd.xlane.f32.xlu0 %v1207
    %v1209 = vpop.xlane.xlu0 %1208
    %1210 = vrot.lane.b32.xlu0 %v466, 32
    %v1211 = vpop.permute.xlu0 %1210
    %1213 = vrot.lane.b32.xlu0 %v905, 64
    %v1214 = vpop.permute.xlu0 %1213
    %v1216 = vsel %vm71, %v1211, %v1214
    %v1217 = vmul.f32 %v1216, %v1193
    %v1218 = vsel %vm73, %v1217, 0.0
    %1219 = vadd.xlane.f32.xlu0 %v1218
    %v1220 = vpop.xlane.xlu0 %1219
    %1221 = vrot.lane.b32.xlu0 %v607, 32
    %v1222 = vpop.permute.xlu0 %1221
    %1224 = vrot.lane.b32.xlu0 %v768, 64
    %v1225 = vpop.permute.xlu0 %1224
    %v1227 = vsel %vm71, %v1222, %v1225
    %v1228 = vmul.f32 %v1227, %v1193
    %v1229 = vsel %vm73, %v1228, 0.0
    %1230 = vadd.xlane.f32.xlu0 %v1229
    %v1231 = vpop.xlane.xlu0 %1230
    %1232 = vrot.lane.b32.xlu0 %v744, 32
    %v1233 = vpop.permute.xlu0 %1232
    %1235 = vrot.lane.b32.xlu0 %v631, 64
    %v1236 = vpop.permute.xlu0 %1235
    %v1238 = vsel %vm71, %v1233, %v1236
    %v1239 = vmul.f32 %v1238, %v1193
    %v1240 = vsel %vm73, %v1239, 0.0
    %1241 = vadd.xlane.f32.xlu0 %v1240
    %v1242 = vpop.xlane.xlu0 %1241
    %1243 = vrot.lane.b32.xlu0 %v881, 32
    %v1244 = vpop.permute.xlu0 %1243
    %1246 = vrot.lane.b32.xlu0 %v490, 64
    %v1247 = vpop.permute.xlu0 %1246
    %v1249 = vsel %vm71, %v1244, %v1247
    %v1250 = vmul.f32 %v1249, %v1193
    %v1251 = vsel %vm73, %v1250, 0.0
    %1252 = vadd.xlane.f32.xlu0 %v1251
    %v1253 = vpop.xlane.xlu0 %1252
    %1254 = vrot.lane.b32.xlu0 %v1018, 32
    %v1255 = vpop.permute.xlu0 %1254
    %1257 = vrot.lane.b32.xlu0 %v349, 64
    %v1258 = vpop.permute.xlu0 %1257
    %v1260 = vsel %vm71, %v1255, %v1258
    %v1261 = vmul.f32 %v1260, %v1193
    %v1262 = vsel %vm73, %v1261, 0.0
    %1263 = vadd.xlane.f32.xlu0 %v1262
    %v1264 = vpop.xlane.xlu0 %1263
    %1266 = vrot.lane.b32.xlu0 %v1155, 32
    %v1267 = vpop.permute.xlu0 %1266
    %1269 = vrot.lane.b32.xlu0 %v208, 64
    %v1270 = vpop.permute.xlu0 %1269
    %v1272 = vsel %vm71, %v1267, %v1270
    %v1273 = vmul.f32 %v1272, %v1193
    %v1274 = vsel %vm73, %v1273, 0.0
    %1275 = vadd.xlane.f32.xlu0 %v1274
    %v1276 = vpop.xlane.xlu0 %1275
    %vm1277 = vcmask 7168
    %v1278 = vsel %vm1277, %v1198, %v1209
    %vm1279 = vcmask 15360
    %v1280 = vsel %vm1279, %v1278, %v1220
    %vm1281 = vcmask 23552
    %v1282 = vsel %vm1281, %v1280, %v1231
    %vm1283 = vcmask 31744
    %v1284 = vsel %vm1283, %v1282, %v1242
    %vm1285 = vcmask 39936
    %v1286 = vsel %vm1285, %v1284, %v1253
    %vm1287 = vcmask 48128
    %v1288 = vsel %vm1287, %v1286, %v1264
    %vm1289 = vcmask 56320
    %v1290 = vsel %vm1289, %v1288, %v1276
    %vm1291 = vcmask 64512
    %v1292 = vsel %vm1291, %v1290, -inf
    %1293 = vmax.xlane.f32.xlu0 %v1292
    %v1294 = vpop.xlane.xlu0 %1293
    %v1295 = vsub.f32 %v1290, %v1294
    %v1296 = vmul.f32 %v1295, 1.442695
    %v1297 = vpow.pop %v1296
    %v1298 = vsel %vm1291, %v1297, 0.0
    %1299 = vadd.xlane.f32.xlu0 %v1298
    %v1300 = vpop.xlane.xlu0 %1299
    %v1301 = vrcp.pop %v1300
    %v1302 = vmul.f32 %v1297, %v1301
    %1304 = vset.pattern.permute.xlu0 0
    %1305 = vperm.xlu0 %1304, %v1302
    %v1306 = vpop.permute.xlu0 %1305
    %v1308 = vmul.f32 %v1188, %v1306
    %v1309 = vadd.f32 %v1308, 0.0
    %1310 = vset.pattern.permute.xlu0 1
    %1311 = vperm.xlu0 %1310, %v1302
    %v1312 = vpop.permute.xlu0 %1311
    %v1314 = vmul.f32 %v1205, %v1312
    %v1315 = vadd.f32 %v1309, %v1314
    %1316 = vset.pattern.permute.xlu0 2
    %1317 = vperm.xlu0 %1316, %v1302
    %v1318 = vpop.permute.xlu0 %1317
    %v1320 = vmul.f32 %v1216, %v1318
    %v1321 = vadd.f32 %v1315, %v1320
    %1322 = vset.pattern.permute.xlu0 3
    %1323 = vperm.xlu0 %1322, %v1302
    %v1324 = vpop.permute.xlu0 %1323
    %v1326 = vmul.f32 %v1227, %v1324
    %v1327 = vadd.f32 %v1321, %v1326
    %1328 = vset.pattern.permute.xlu0 4
    %1329 = vperm.xlu0 %1328, %v1302
    %v1330 = vpop.permute.xlu0 %1329
    %v1332 = vmul.f32 %v1238, %v1330
    %v1333 = vadd.f32 %v1327, %v1332
    %1334 = vset.pattern.permute.xlu0 5
    %1335 = vperm.xlu0 %1334, %v1302
    %v1336 = vpop.permute.xlu0 %1335
    %v1338 = vmul.f32 %v1249, %v1336
    %v1339 = vadd.f32 %v1333, %v1338
    %1340 = vset.pattern.permute.xlu0 6
    %1341 = vperm.xlu0 %1340, %v1302
    %v1342 = vpop.permute.xlu0 %1341
    %v1344 = vmul.f32 %v1260, %v1342
    %v1345 = vadd.f32 %v1339, %v1344
    %1346 = vset.pattern.permute.xlu0 7
    %1347 = vperm.xlu0 %1346, %v1302
    %v1348 = vpop.permute.xlu0 %1347
    %v1350 = vmul.f32 %v1272, %v1348
    %v1351 = vadd.f32 %v1345, %v1350
    %v1352 = vld [vmem:[%s4] sm:$0xff]
    %v1353 = vld [vmem:[%s4 + $0x8] sm:$0xff]
    %v1354 = vld [vmem:[%s4 + $0x10] sm:$0xff]
    %v1355 = vld [vmem:[%s4 + $0x18] sm:$0xff]
    %v1356 = vld [vmem:[%s4 + $0x20] sm:$0xff]
    %v1357 = vld [vmem:[%s4 + $0x28] sm:$0xff]
    %v1358 = vld [vmem:[%s4 + $0x30] sm:$0xff]
    %v1359 = vld [vmem:[%s4 + $0x38] sm:$0xff]
    %v1360 = vld [vmem:[%s5] sm:$0x1]
    %v1362 = vlaneseq
    %v1363 = vshrl.u32 %v1362, 7
    %v1364 = vsub.s32 0, %v1363
    %v1365 = vrot.slane %v1360, %v1364
    %v1368 = vsel %vm73, %v1351, 0
    %1370 = vmatprep.subr.mxu0 0.0
    %1371 = vmatpush1.msra.mxu0 %v1352
    %1372 = vmatprep.subr.mxu0 0.0
    %1373 = vmatpush1.msra.mxu0 %v1353
    %1374 = vmatprep.subr.mxu0 0.0
    %1375 = vmatpush1.msra.mxu0 %v1354
    %1376 = vmatprep.subr.mxu0 0.0
    %1377 = vmatpush1.msra.mxu0 %v1355
    %1378 = vmatprep.subr.mxu0 0.0
    %1379 = vmatpush1.msra.mxu0 %v1356
    %1380 = vmatprep.subr.mxu0 0.0
    %1381 = vmatpush1.msra.mxu0 %v1357
    %1382 = vmatprep.subr.mxu0 0.0
    %1383 = vmatpush1.msra.mxu0 %v1358
    %1384 = vmatprep.subr.mxu0 0.0
    %1385 = vmatpush1.msra.mxu0 %v1359
    %1386 = vmatprep.subr.mxu0 0.0
    %1387 = vmatpush1.msra.mxu0 0.0
    %1388 = vmatprep.subr.mxu0 0.0
    %1389 = vmatpush1.msra.mxu0 0.0
    %1390 = vmatprep.subr.mxu0 0.0
    %1391 = vmatpush1.msra.mxu0 0.0
    %1392 = vmatprep.subr.mxu0 0.0
    %1393 = vmatpush1.msra.mxu0 0.0
    %1394 = vmatprep.subr.mxu0 0.0
    %1395 = vmatpush1.msra.mxu0 0.0
    %1396 = vmatprep.subr.mxu0 0.0
    %1397 = vmatpush1.msra.mxu0 0.0
    %1398 = vmatprep.subr.mxu0 0.0
    %1399 = vmatpush1.msra.mxu0 0.0
    %1400 = vmatprep.subr.mxu0 0.0
    %1401 = vmatpush1.msra.mxu0 0.0
    %1402 = vmatprep.subr.mxu0 0.0
    %1403 = vmatpush1.msra.mxu0 0.0
    %1404 = vmatprep.subr.mxu0 0.0
    %1405 = vmatpush1.msra.mxu0 0.0
    %1406 = vmatprep.subr.mxu0 0.0
    %1407 = vmatpush1.msra.mxu0 0.0
    %1408 = vmatprep.subr.mxu0 0.0
    %1409 = vmatpush1.msra.mxu0 0.0
    %1410 = vmatprep.subr.mxu0 0.0
    %1411 = vmatpush1.msra.mxu0 0.0
    %1412 = vmatprep.subr.mxu0 0.0
    %1413 = vmatpush1.msra.mxu0 0.0
    %1414 = vmatprep.subr.mxu0 0.0
    %1415 = vmatpush1.msra.mxu0 0.0
    %1416 = vmatprep.subr.mxu0 0.0
    %1417 = vmatpush1.msra.mxu0 0.0
    %1418 = vmatprep.subr.mxu0 0.0
    %1419 = vmatpush1.msra.mxu0 0.0
    %1420 = vmatprep.subr.mxu0 0.0
    %1421 = vmatpush1.msra.mxu0 0.0
    %1422 = vmatprep.subr.mxu0 0.0
    %1423 = vmatpush1.msra.mxu0 0.0
    %1424 = vmatprep.subr.mxu0 0.0
    %1425 = vmatpush1.msra.mxu0 0.0
    %1426 = vmatprep.subr.mxu0 0.0
    %1427 = vmatpush1.msra.mxu0 0.0
    %1428 = vmatprep.subr.mxu0 0.0
    %1429 = vmatpush1.msra.mxu0 0.0
    %1430 = vmatprep.subr.mxu0 0.0
    %1431 = vmatpush1.msra.mxu0 0.0
    %1432 = vmatprep.subr.mxu0 0.0
    %1433 = vmatpush1.msra.mxu0 0.0
    %1434 = vmatprep.mubr.f32.mxu0 0.0
    %1435 = vmatmul.mubr.f32.gmra.mrb[0].mxu0 %v1368
    %v1436 = vpop.f32.mrb[0].mxu0
    %v1437 = vadd.f32 %v1365, %v1436
    %v1438 = vpop.f32.mrb[0].mxu0
    %1439 = vdwg.mxu0
    %1440 = vst.msk [vmem:[%s6] sm:$0xff] %vm1279, %v1437
    // Predicated region
    $region30: #{tpu_custom_call.1} parent=1 // pred_check
      _
    $region31: #{tpu_custom_call.1} parent=1 // pred_check_branch
      %1442 = sbr.rel (0) target = $region33
    $region32: #{tpu_custom_call.1} parent=1 // pred_region
      _
    $region33: #{tpu_custom_call.1} parent=1 // pred_fallthru
      _
    // Predicated region
    $region34: #{tpu_custom_call.1} parent=1 // pred_check
      _
    $region35: #{tpu_custom_call.1} parent=1 // pred_check_branch
      %1444 = sbr.rel (0) target = $region37
    $region36: #{tpu_custom_call.1} parent=1 // pred_region
      _
    $region37: #{tpu_custom_call.1} parent=1 // pred_fallthru
      _
    %1445 = vsyncpa [#allocation3], 1

</llo_original>
